<compile_context>
chip_gen: v7x
topology: tpu7x:2x2x1
jax: 0.10.0
libtpu: 0.0.40
codegen_flags: <defaults>
</compile_context>

<pallas_src>
import functools
import math

import jax
import jax.numpy as jnp
from jax import lax
from jax.experimental import pallas as pl
from jax.experimental.pallas import tpu as pltpu


# ----------------------------------------------------------------------------
# Fused MHA kernel: one batch row per grid step, (B, S, D) layout end to end.
# ----------------------------------------------------------------------------
def _mha_fused_kernel(q_ref, k_ref, v_ref, mask_ref,
                      wq_ref, bq_ref, wk_ref, bk_ref, wv_ref, bv_ref,
                      wo_ref, bo_ref, o_ref, *, num_heads, scale):
    x_q = q_ref[0]                      # (S, D) query input for this batch row
    x_k = k_ref[0]                      # (S, D)
    x_v = v_ref[0]                      # (S, D)
    m = mask_ref[0]                     # (1, S) key-padding mask (1=keep, 0=mask)

    # Q/K/V projections (nn.Linear: x @ W + b). Weights stay resident in VMEM.
    q = jnp.dot(x_q, wq_ref[...], preferred_element_type=jnp.float32) + bq_ref[...]
    k = jnp.dot(x_k, wk_ref[...], preferred_element_type=jnp.float32) + bk_ref[...]
    v = jnp.dot(x_v, wv_ref[...], preferred_element_type=jnp.float32) + bv_ref[...]

    d_model = q.shape[-1]
    d_k = d_model // num_heads
    neg_inf = jnp.float32(-1e9)
    scale_f = jnp.float32(scale)

    head_ctx = []
    for hd in range(num_heads):         # static head loop; static lane slices
        sl = slice(hd * d_k, (hd + 1) * d_k)
        qh = q[:, sl] * scale_f         # pre-scale Q: S*d_k muls, not S*S
        kh = k[:, sl]
        vh = v[:, sl]

        # scores = (Q/sqrt(d_k)) @ K^T   -- contract on d_k, no transpose copy.
        scores = lax.dot_general(
            qh, kh, (((1,), (1,)), ((), ())),
            preferred_element_type=jnp.float32,
        )                               # (S_q, S_k)
        scores = jnp.where(m == 0, neg_inf, scores)

        # Numerically stable softmax; normalize AFTER the P@V matmul so the
        # broadcasted multiply touches (S, d_k) instead of (S, S).
        smax = jnp.max(scores, axis=-1, keepdims=True)
        p = jnp.exp(scores - smax)
        denom = jnp.sum(p, axis=-1, keepdims=True)

        # TODO(synk): dropout(p_attn, p=0.1) is identity here (inference mode).

        ctx = jnp.dot(p.astype(vh.dtype), vh, preferred_element_type=jnp.float32)
        ctx = ctx * pl.reciprocal(denom, approx=False)   # exact; EUP if approx
        head_ctx.append(ctx)

    # Concatenate heads -> lane-dense (S, d_model) context, then output proj.
    ctx = jnp.concatenate(head_ctx, axis=-1)
    out = jnp.dot(ctx.astype(x_q.dtype), wo_ref[...],
                  preferred_element_type=jnp.float32) + bo_ref[...]
    o_ref[0] = out.astype(o_ref.dtype)


def _vmem_budget_bytes(B, S, D, dtype):
    """Estimate the per-step VMEM footprint and return a clamped limit."""
    elt = jnp.dtype(dtype).itemsize
    # double-buffered per-batch blocks: q/k/v in, out, mask
    blocks = 2 * (4 * S * D * elt + S * 4)
    # resident weights + biases (4 linear layers)
    weights = 4 * (D * D + D) * elt
    # in-kernel f32 temporaries: projected q/k/v, one head's scores + exp, ctx
    scratch = (3 * S * D + 2 * S * S + S * D) * 4
    est = blocks + weights + scratch
    # 4x headroom for Mosaic internal scratch; clamp under v7x's 64 MiB VMEM.
    return int(min(max(4 * est, 16 * 1024 * 1024), 56 * 1024 * 1024)), est


# ----------------------------------------------------------------------------
# MultiHeadedAttention forward (Pallas) and pure-JAX reference.
# ----------------------------------------------------------------------------
def multi_headed_attention_pallas(query, key, value, mask, params, h):
    """params = (wq, bq, wk, bk, wv, bv, wo, bo); each w is (d_in, d_out),
    i.e. the transpose of PyTorch nn.Linear.weight.  mask: (batch, seq)."""
    wq, bq, wk, bk, wv, bv, wo, bo = params
    B, S, D = query.shape
    d_k = D // h
    scale = 1.0 / math.sqrt(d_k)

    vmem_limit, est = _vmem_budget_bytes(B, S, D, query.dtype)
    if est > 56 * 1024 * 1024:
        # TODO(synk): key-blocked (flash) tiling for long sequences.
        raise NotImplementedError("sequence too long for single-block softmax")

    mask3 = mask.reshape(B, 1, S)       # (B, 1, S) -> per-batch (1,1,S) blocks

    x_spec = pl.BlockSpec((1, S, D), lambda b: (b, 0, 0))
    w_spec = pl.BlockSpec((D, D), lambda b: (0, 0))     # resident across grid
    b_spec = pl.BlockSpec((1, D), lambda b: (0, 0))     # resident across grid

    out = pl.pallas_call(
        functools.partial(_mha_fused_kernel, num_heads=h, scale=scale),
        out_shape=jax.ShapeDtypeStruct((B, S, D), query.dtype),
        grid_spec=pltpu.PrefetchScalarGridSpec(
            num_scalar_prefetch=0,
            grid=(B,),
            in_specs=[
                x_spec, x_spec, x_spec,                      # query, key, value
                pl.BlockSpec((1, 1, S), lambda b: (b, 0, 0)),  # per-batch mask
                w_spec, b_spec,                              # wq, bq
                w_spec, b_spec,                              # wk, bk
                w_spec, b_spec,                              # wv, bv
                w_spec, b_spec,                              # wo, bo
            ],
            out_specs=pl.BlockSpec((1, S, D), lambda b: (b, 0, 0)),
        ),
        compiler_params=pltpu.CompilerParams(
            dimension_semantics=("parallel",),   # megacore sharding on v7x
            vmem_limit_bytes=vmem_limit,
        ),
    )(query, key, value, mask3,
      wq, bq.reshape(1, D), wk, bk.reshape(1, D),
      wv, bv.reshape(1, D), wo, bo.reshape(1, D))
    return out


def multi_headed_attention_reference(query, key, value, mask, params, h):
    wq, bq, wk, bk, wv, bv, wo, bo = params
    B, S, D = query.shape
    d_k = D // h
    hp = lax.Precision.HIGHEST

    def lin(x, w, b):
        return jnp.dot(x, w, precision=hp) + b

    q = lin(query, wq, bq).reshape(B, S, h, d_k).transpose(0, 2, 1, 3)
    k = lin(key, wk, bk).reshape(B, S, h, d_k).transpose(0, 2, 1, 3)
    v = lin(value, wv, bv).reshape(B, S, h, d_k).transpose(0, 2, 1, 3)

    scores = jnp.einsum("bhqd,bhkd->bhqk", q, k, precision=hp) / math.sqrt(d_k)
    scores = jnp.where(mask[:, None, None, :] == 0, -1e9, scores)
    p = jax.nn.softmax(scores, axis=-1)
    ctx = jnp.einsum("bhqk,bhkd->bhqd", p, v, precision=hp)
    ctx = ctx.transpose(0, 2, 1, 3).reshape(B, S, D)
    return lin(ctx, wo, bo)


if __name__ == "__main__":
    # Small shapes consistent with the module: h=4, d_model=32 -> d_k=8.
    batch, seq, d_model, n_heads = 2, 8, 32, 4

    root = jax.random.PRNGKey(0)
    keys = jax.random.split(root, 11)

    query = jax.random.normal(keys[0], (batch, seq, d_model), dtype=jnp.float32)
    key_in = jax.random.normal(keys[1], (batch, seq, d_model), dtype=jnp.float32)
    value = jax.random.normal(keys[2], (batch, seq, d_model), dtype=jnp.float32)

    # Key-padding mask: batch 0 fully valid, batch 1 only first 5 positions.
    lengths = jnp.array([seq, 5], dtype=jnp.int32)
    mask = (jnp.arange(seq, dtype=jnp.int32)[None, :] < lengths[:, None]).astype(jnp.int32)

    def init_linear(kw, kb, d_in, d_out):
        bound = 1.0 / math.sqrt(d_in)
        w = jax.random.uniform(kw, (d_in, d_out), jnp.float32, -bound, bound)
        b = jax.random.uniform(kb, (d_out,), jnp.float32, -bound, bound)
        return w, b

    params = []
    for i in range(4):
        w, b = init_linear(keys[3 + 2 * i], keys[4 + 2 * i], d_model, d_model)
        params.extend([w, b])
    params = tuple(params)

    out = multi_headed_attention_pallas(query, key_in, value, mask, params, n_heads)
    out = jax.block_until_ready(out)

    ref = multi_headed_attention_reference(query, key_in, value, mask, params, n_heads)
    assert out.shape == (batch, seq, d_model), (out.shape,)
    max_err = float(jnp.max(jnp.abs(out - ref)))
    assert jnp.allclose(out, ref, atol=2e-4, rtol=2e-4), max_err

    print("KERNEL_OK")
</pallas_src>

<mosaic_0001>
module attributes {stable_mosaic.version = 11 : i64} {
  func.func @_mha_fused_kernel(%arg0: i32, %arg1: memref<1x8x32xf32, #tpu.memory_space<vmem>>, %arg2: memref<1x8x32xf32, #tpu.memory_space<vmem>>, %arg3: memref<1x8x32xf32, #tpu.memory_space<vmem>>, %arg4: memref<1x1x8xi32, #tpu.memory_space<vmem>>, %arg5: memref<32x32xf32, #tpu.memory_space<vmem>>, %arg6: memref<1x32xf32, #tpu.memory_space<vmem>>, %arg7: memref<32x32xf32, #tpu.memory_space<vmem>>, %arg8: memref<1x32xf32, #tpu.memory_space<vmem>>, %arg9: memref<32x32xf32, #tpu.memory_space<vmem>>, %arg10: memref<1x32xf32, #tpu.memory_space<vmem>>, %arg11: memref<32x32xf32, #tpu.memory_space<vmem>>, %arg12: memref<1x32xf32, #tpu.memory_space<vmem>>, %arg13: memref<1x8x32xf32, #tpu.memory_space<vmem>>) attributes {dimension_semantics = [#tpu.dimension_semantics<parallel>], iteration_bounds = array<i64: 2>, scalar_prefetch = 0 : i64, scratch_operands = 0 : i64, tpu.core_type = #tpu.core_type<tc>, window_params = [{transform_indices = @transform_0, window_bounds = array<i64: 1, 8, 32>}, {transform_indices = @transform_1, window_bounds = array<i64: 1, 8, 32>}, {transform_indices = @transform_2, window_bounds = array<i64: 1, 8, 32>}, {transform_indices = @transform_3, window_bounds = array<i64: 1, 1, 8>}, {pipeline_mode = #tpu.pipeline_mode<synchronous>, transform_indices = @transform_4, window_bounds = array<i64: 32, 32>}, {pipeline_mode = #tpu.pipeline_mode<synchronous>, transform_indices = @transform_5, window_bounds = array<i64: 1, 32>}, {pipeline_mode = #tpu.pipeline_mode<synchronous>, transform_indices = @transform_6, window_bounds = array<i64: 32, 32>}, {pipeline_mode = #tpu.pipeline_mode<synchronous>, transform_indices = @transform_7, window_bounds = array<i64: 1, 32>}, {pipeline_mode = #tpu.pipeline_mode<synchronous>, transform_indices = @transform_8, window_bounds = array<i64: 32, 32>}, {pipeline_mode = #tpu.pipeline_mode<synchronous>, transform_indices = @transform_9, window_bounds = array<i64: 1, 32>}, {pipeline_mode = #tpu.pipeline_mode<synchronous>, transform_indices = @transform_10, window_bounds = array<i64: 32, 32>}, {pipeline_mode = #tpu.pipeline_mode<synchronous>, transform_indices = @transform_11, window_bounds = array<i64: 1, 32>}, {transform_indices = @transform_12, window_bounds = array<i64: 1, 8, 32>}]} {
    %c0 = arith.constant 0 : index
    %c0_0 = arith.constant 0 : index
    %c0_1 = arith.constant 0 : index
    %0 = vector.load %arg1[%c0, %c0_0, %c0_1] : memref<1x8x32xf32, #tpu.memory_space<vmem>>, vector<1x8x32xf32>
    %1 = vector.shape_cast %0 : vector<1x8x32xf32> to vector<8x32xf32>
    %c0_2 = arith.constant 0 : index
    %c0_3 = arith.constant 0 : index
    %c0_4 = arith.constant 0 : index
    %2 = vector.load %arg2[%c0_2, %c0_3, %c0_4] : memref<1x8x32xf32, #tpu.memory_space<vmem>>, vector<1x8x32xf32>
    %3 = vector.shape_cast %2 : vector<1x8x32xf32> to vector<8x32xf32>
    %c0_5 = arith.constant 0 : index
    %c0_6 = arith.constant 0 : index
    %c0_7 = arith.constant 0 : index
    %4 = vector.load %arg3[%c0_5, %c0_6, %c0_7] : memref<1x8x32xf32, #tpu.memory_space<vmem>>, vector<1x8x32xf32>
    %5 = vector.shape_cast %4 : vector<1x8x32xf32> to vector<8x32xf32>
    %c0_8 = arith.constant 0 : index
    %c0_9 = arith.constant 0 : index
    %c0_10 = arith.constant 0 : index
    %6 = vector.load %arg4[%c0_8, %c0_9, %c0_10] : memref<1x1x8xi32, #tpu.memory_space<vmem>>, vector<1x1x8xi32>
    %7 = vector.shape_cast %6 : vector<1x1x8xi32> to vector<1x8xi32>
    %c0_11 = arith.constant 0 : index
    %c0_12 = arith.constant 0 : index
    %8 = vector.load %arg5[%c0_11, %c0_12] : memref<32x32xf32, #tpu.memory_space<vmem>>, vector<32x32xf32>
    %cst = arith.constant dense<0.000000e+00> : vector<8x32xf32>
    %9 = tpu.matmul %1, %8, %cst {dimension_numbers = #tpu.dot_dimension_numbers<[1], [0], [0], [1], [0, 0, 1, 1], [], []>} : vector<8x32xf32>, vector<32x32xf32>, vector<8x32xf32> -> vector<8x32xf32>
    %c0_13 = arith.constant 0 : index
    %c0_14 = arith.constant 0 : index
    %10 = vector.load %arg6[%c0_13, %c0_14] : memref<1x32xf32, #tpu.memory_space<vmem>>, vector<1x32xf32>
    %11 = vector.broadcast %10 : vector<1x32xf32> to vector<8x32xf32>
    %12 = arith.addf %9, %11 : vector<8x32xf32>
    %c0_15 = arith.constant 0 : index
    %c0_16 = arith.constant 0 : index
    %13 = vector.load %arg7[%c0_15, %c0_16] : memref<32x32xf32, #tpu.memory_space<vmem>>, vector<32x32xf32>
    %cst_17 = arith.constant dense<0.000000e+00> : vector<8x32xf32>
    %14 = tpu.matmul %3, %13, %cst_17 {dimension_numbers = #tpu.dot_dimension_numbers<[1], [0], [0], [1], [0, 0, 1, 1], [], []>} : vector<8x32xf32>, vector<32x32xf32>, vector<8x32xf32> -> vector<8x32xf32>
    %c0_18 = arith.constant 0 : index
    %c0_19 = arith.constant 0 : index
    %15 = vector.load %arg8[%c0_18, %c0_19] : memref<1x32xf32, #tpu.memory_space<vmem>>, vector<1x32xf32>
    %16 = vector.broadcast %15 : vector<1x32xf32> to vector<8x32xf32>
    %17 = arith.addf %14, %16 : vector<8x32xf32>
    %c0_20 = arith.constant 0 : index
    %c0_21 = arith.constant 0 : index
    %18 = vector.load %arg9[%c0_20, %c0_21] : memref<32x32xf32, #tpu.memory_space<vmem>>, vector<32x32xf32>
    %cst_22 = arith.constant dense<0.000000e+00> : vector<8x32xf32>
    %19 = tpu.matmul %5, %18, %cst_22 {dimension_numbers = #tpu.dot_dimension_numbers<[1], [0], [0], [1], [0, 0, 1, 1], [], []>} : vector<8x32xf32>, vector<32x32xf32>, vector<8x32xf32> -> vector<8x32xf32>
    %c0_23 = arith.constant 0 : index
    %c0_24 = arith.constant 0 : index
    %20 = vector.load %arg10[%c0_23, %c0_24] : memref<1x32xf32, #tpu.memory_space<vmem>>, vector<1x32xf32>
    %21 = vector.broadcast %20 : vector<1x32xf32> to vector<8x32xf32>
    %22 = arith.addf %19, %21 : vector<8x32xf32>
    %23 = vector.extract_strided_slice %12 {offsets = [0, 0], sizes = [8, 8], strides = [1, 1]} : vector<8x32xf32> to vector<8x8xf32>
    %cst_25 = arith.constant 0.353553385 : f32
    %24 = vector.broadcast %cst_25 : f32 to vector<8x8xf32>
    %25 = arith.mulf %23, %24 : vector<8x8xf32>
    %26 = vector.extract_strided_slice %17 {offsets = [0, 0], sizes = [8, 8], strides = [1, 1]} : vector<8x32xf32> to vector<8x8xf32>
    %27 = vector.extract_strided_slice %22 {offsets = [0, 0], sizes = [8, 8], strides = [1, 1]} : vector<8x32xf32> to vector<8x8xf32>
    %cst_26 = arith.constant dense<0.000000e+00> : vector<8x8xf32>
    %28 = tpu.matmul %25, %26, %cst_26 {dimension_numbers = #tpu.dot_dimension_numbers<[1], [1], [0], [0], [0, 0, 1, 0], [], []>} : vector<8x8xf32>, vector<8x8xf32>, vector<8x8xf32> -> vector<8x8xf32>
    %c0_i32 = arith.constant 0 : i32
    %29 = vector.broadcast %c0_i32 : i32 to vector<1x8xi32>
    %30 = arith.cmpi eq, %7, %29 : vector<1x8xi32>
    %cst_27 = arith.constant -1.000000e+09 : f32
    %31 = vector.shape_cast %30 : vector<1x8xi1> to vector<1x8xi1>
    %32 = vector.broadcast %31 : vector<1x8xi1> to vector<8x8xi1>
    %33 = vector.broadcast %cst_27 : f32 to vector<8x8xf32>
    %34 = arith.select %32, %33, %28 : vector<8x8xi1>, vector<8x8xf32>
    %cst_28 = arith.constant dense<0xFF800000> : vector<8xf32>
    %35 = vector.multi_reduction <maximumf>, %34, %cst_28 [1] : vector<8x8xf32> to vector<8xf32>
    %36 = vector.shape_cast %35 : vector<8xf32> to vector<8x1xf32>
    %37 = vector.broadcast %36 : vector<8x1xf32> to vector<8x8xf32>
    %38 = arith.subf %34, %37 : vector<8x8xf32>
    %39 = math.exp %38 : vector<8x8xf32>
    %cst_29 = arith.constant dense<0.000000e+00> : vector<8xf32>
    %40 = vector.multi_reduction <add>, %39, %cst_29 [1] : vector<8x8xf32> to vector<8xf32>
    %41 = vector.shape_cast %40 : vector<8xf32> to vector<8x1xf32>
    %cst_30 = arith.constant dense<0.000000e+00> : vector<8x8xf32>
    %42 = tpu.matmul %39, %27, %cst_30 {dimension_numbers = #tpu.dot_dimension_numbers<[1], [0], [0], [1], [0, 0, 1, 1], [], []>} : vector<8x8xf32>, vector<8x8xf32>, vector<8x8xf32> -> vector<8x8xf32>
    %43 = tpu.reciprocal %41 : vector<8x1xf32> -> vector<8x1xf32>
    %44 = vector.broadcast %43 : vector<8x1xf32> to vector<8x8xf32>
    %45 = arith.mulf %42, %44 : vector<8x8xf32>
    %46 = vector.extract_strided_slice %12 {offsets = [0, 8], sizes = [8, 8], strides = [1, 1]} : vector<8x32xf32> to vector<8x8xf32>
    %cst_31 = arith.constant 0.353553385 : f32
    %47 = vector.broadcast %cst_31 : f32 to vector<8x8xf32>
    %48 = arith.mulf %46, %47 : vector<8x8xf32>
    %49 = vector.extract_strided_slice %17 {offsets = [0, 8], sizes = [8, 8], strides = [1, 1]} : vector<8x32xf32> to vector<8x8xf32>
    %50 = vector.extract_strided_slice %22 {offsets = [0, 8], sizes = [8, 8], strides = [1, 1]} : vector<8x32xf32> to vector<8x8xf32>
    %cst_32 = arith.constant dense<0.000000e+00> : vector<8x8xf32>
    %51 = tpu.matmul %48, %49, %cst_32 {dimension_numbers = #tpu.dot_dimension_numbers<[1], [1], [0], [0], [0, 0, 1, 0], [], []>} : vector<8x8xf32>, vector<8x8xf32>, vector<8x8xf32> -> vector<8x8xf32>
    %c0_i32_33 = arith.constant 0 : i32
    %52 = vector.broadcast %c0_i32_33 : i32 to vector<1x8xi32>
    %53 = arith.cmpi eq, %7, %52 : vector<1x8xi32>
    %cst_34 = arith.constant -1.000000e+09 : f32
    %54 = vector.shape_cast %53 : vector<1x8xi1> to vector<1x8xi1>
    %55 = vector.broadcast %54 : vector<1x8xi1> to vector<8x8xi1>
    %56 = vector.broadcast %cst_34 : f32 to vector<8x8xf32>
    %57 = arith.select %55, %56, %51 : vector<8x8xi1>, vector<8x8xf32>
    %cst_35 = arith.constant dense<0xFF800000> : vector<8xf32>
    %58 = vector.multi_reduction <maximumf>, %57, %cst_35 [1] : vector<8x8xf32> to vector<8xf32>
    %59 = vector.shape_cast %58 : vector<8xf32> to vector<8x1xf32>
    %60 = vector.broadcast %59 : vector<8x1xf32> to vector<8x8xf32>
    %61 = arith.subf %57, %60 : vector<8x8xf32>
    %62 = math.exp %61 : vector<8x8xf32>
    %cst_36 = arith.constant dense<0.000000e+00> : vector<8xf32>
    %63 = vector.multi_reduction <add>, %62, %cst_36 [1] : vector<8x8xf32> to vector<8xf32>
    %64 = vector.shape_cast %63 : vector<8xf32> to vector<8x1xf32>
    %cst_37 = arith.constant dense<0.000000e+00> : vector<8x8xf32>
    %65 = tpu.matmul %62, %50, %cst_37 {dimension_numbers = #tpu.dot_dimension_numbers<[1], [0], [0], [1], [0, 0, 1, 1], [], []>} : vector<8x8xf32>, vector<8x8xf32>, vector<8x8xf32> -> vector<8x8xf32>
    %66 = tpu.reciprocal %64 : vector<8x1xf32> -> vector<8x1xf32>
    %67 = vector.broadcast %66 : vector<8x1xf32> to vector<8x8xf32>
    %68 = arith.mulf %65, %67 : vector<8x8xf32>
    %69 = vector.extract_strided_slice %12 {offsets = [0, 16], sizes = [8, 8], strides = [1, 1]} : vector<8x32xf32> to vector<8x8xf32>
    %cst_38 = arith.constant 0.353553385 : f32
    %70 = vector.broadcast %cst_38 : f32 to vector<8x8xf32>
    %71 = arith.mulf %69, %70 : vector<8x8xf32>
    %72 = vector.extract_strided_slice %17 {offsets = [0, 16], sizes = [8, 8], strides = [1, 1]} : vector<8x32xf32> to vector<8x8xf32>
    %73 = vector.extract_strided_slice %22 {offsets = [0, 16], sizes = [8, 8], strides = [1, 1]} : vector<8x32xf32> to vector<8x8xf32>
    %cst_39 = arith.constant dense<0.000000e+00> : vector<8x8xf32>
    %74 = tpu.matmul %71, %72, %cst_39 {dimension_numbers = #tpu.dot_dimension_numbers<[1], [1], [0], [0], [0, 0, 1, 0], [], []>} : vector<8x8xf32>, vector<8x8xf32>, vector<8x8xf32> -> vector<8x8xf32>
    %c0_i32_40 = arith.constant 0 : i32
    %75 = vector.broadcast %c0_i32_40 : i32 to vector<1x8xi32>
    %76 = arith.cmpi eq, %7, %75 : vector<1x8xi32>
    %cst_41 = arith.constant -1.000000e+09 : f32
    %77 = vector.shape_cast %76 : vector<1x8xi1> to vector<1x8xi1>
    %78 = vector.broadcast %77 : vector<1x8xi1> to vector<8x8xi1>
    %79 = vector.broadcast %cst_41 : f32 to vector<8x8xf32>
    %80 = arith.select %78, %79, %74 : vector<8x8xi1>, vector<8x8xf32>
    %cst_42 = arith.constant dense<0xFF800000> : vector<8xf32>
    %81 = vector.multi_reduction <maximumf>, %80, %cst_42 [1] : vector<8x8xf32> to vector<8xf32>
    %82 = vector.shape_cast %81 : vector<8xf32> to vector<8x1xf32>
    %83 = vector.broadcast %82 : vector<8x1xf32> to vector<8x8xf32>
    %84 = arith.subf %80, %83 : vector<8x8xf32>
    %85 = math.exp %84 : vector<8x8xf32>
    %cst_43 = arith.constant dense<0.000000e+00> : vector<8xf32>
    %86 = vector.multi_reduction <add>, %85, %cst_43 [1] : vector<8x8xf32> to vector<8xf32>
    %87 = vector.shape_cast %86 : vector<8xf32> to vector<8x1xf32>
    %cst_44 = arith.constant dense<0.000000e+00> : vector<8x8xf32>
    %88 = tpu.matmul %85, %73, %cst_44 {dimension_numbers = #tpu.dot_dimension_numbers<[1], [0], [0], [1], [0, 0, 1, 1], [], []>} : vector<8x8xf32>, vector<8x8xf32>, vector<8x8xf32> -> vector<8x8xf32>
    %89 = tpu.reciprocal %87 : vector<8x1xf32> -> vector<8x1xf32>
    %90 = vector.broadcast %89 : vector<8x1xf32> to vector<8x8xf32>
    %91 = arith.mulf %88, %90 : vector<8x8xf32>
    %92 = vector.extract_strided_slice %12 {offsets = [0, 24], sizes = [8, 8], strides = [1, 1]} : vector<8x32xf32> to vector<8x8xf32>
    %cst_45 = arith.constant 0.353553385 : f32
    %93 = vector.broadcast %cst_45 : f32 to vector<8x8xf32>
    %94 = arith.mulf %92, %93 : vector<8x8xf32>
    %95 = vector.extract_strided_slice %17 {offsets = [0, 24], sizes = [8, 8], strides = [1, 1]} : vector<8x32xf32> to vector<8x8xf32>
    %96 = vector.extract_strided_slice %22 {offsets = [0, 24], sizes = [8, 8], strides = [1, 1]} : vector<8x32xf32> to vector<8x8xf32>
    %cst_46 = arith.constant dense<0.000000e+00> : vector<8x8xf32>
    %97 = tpu.matmul %94, %95, %cst_46 {dimension_numbers = #tpu.dot_dimension_numbers<[1], [1], [0], [0], [0, 0, 1, 0], [], []>} : vector<8x8xf32>, vector<8x8xf32>, vector<8x8xf32> -> vector<8x8xf32>
    %c0_i32_47 = arith.constant 0 : i32
    %98 = vector.broadcast %c0_i32_47 : i32 to vector<1x8xi32>
    %99 = arith.cmpi eq, %7, %98 : vector<1x8xi32>
    %cst_48 = arith.constant -1.000000e+09 : f32
    %100 = vector.shape_cast %99 : vector<1x8xi1> to vector<1x8xi1>
    %101 = vector.broadcast %100 : vector<1x8xi1> to vector<8x8xi1>
    %102 = vector.broadcast %cst_48 : f32 to vector<8x8xf32>
    %103 = arith.select %101, %102, %97 : vector<8x8xi1>, vector<8x8xf32>
    %cst_49 = arith.constant dense<0xFF800000> : vector<8xf32>
    %104 = vector.multi_reduction <maximumf>, %103, %cst_49 [1] : vector<8x8xf32> to vector<8xf32>
    %105 = vector.shape_cast %104 : vector<8xf32> to vector<8x1xf32>
    %106 = vector.broadcast %105 : vector<8x1xf32> to vector<8x8xf32>
    %107 = arith.subf %103, %106 : vector<8x8xf32>
    %108 = math.exp %107 : vector<8x8xf32>
    %cst_50 = arith.constant dense<0.000000e+00> : vector<8xf32>
    %109 = vector.multi_reduction <add>, %108, %cst_50 [1] : vector<8x8xf32> to vector<8xf32>
    %110 = vector.shape_cast %109 : vector<8xf32> to vector<8x1xf32>
    %cst_51 = arith.constant dense<0.000000e+00> : vector<8x8xf32>
    %111 = tpu.matmul %108, %96, %cst_51 {dimension_numbers = #tpu.dot_dimension_numbers<[1], [0], [0], [1], [0, 0, 1, 1], [], []>} : vector<8x8xf32>, vector<8x8xf32>, vector<8x8xf32> -> vector<8x8xf32>
    %112 = tpu.reciprocal %110 : vector<8x1xf32> -> vector<8x1xf32>
    %113 = vector.broadcast %112 : vector<8x1xf32> to vector<8x8xf32>
    %114 = arith.mulf %111, %113 : vector<8x8xf32>
    %115 = tpu.concatenate %45, %68, %91, %114 in 1 : vector<8x8xf32>, vector<8x8xf32>, vector<8x8xf32>, vector<8x8xf32> -> vector<8x32xf32>
    %c0_52 = arith.constant 0 : index
    %c0_53 = arith.constant 0 : index
    %116 = vector.load %arg11[%c0_52, %c0_53] : memref<32x32xf32, #tpu.memory_space<vmem>>, vector<32x32xf32>
    %cst_54 = arith.constant dense<0.000000e+00> : vector<8x32xf32>
    %117 = tpu.matmul %115, %116, %cst_54 {dimension_numbers = #tpu.dot_dimension_numbers<[1], [0], [0], [1], [0, 0, 1, 1], [], []>} : vector<8x32xf32>, vector<32x32xf32>, vector<8x32xf32> -> vector<8x32xf32>
    %c0_55 = arith.constant 0 : index
    %c0_56 = arith.constant 0 : index
    %118 = vector.load %arg12[%c0_55, %c0_56] : memref<1x32xf32, #tpu.memory_space<vmem>>, vector<1x32xf32>
    %119 = vector.broadcast %118 : vector<1x32xf32> to vector<8x32xf32>
    %120 = arith.addf %117, %119 : vector<8x32xf32>
    %c0_57 = arith.constant 0 : index
    %c0_58 = arith.constant 0 : index
    %c0_59 = arith.constant 0 : index
    %121 = vector.load %arg13[%c0_57, %c0_58, %c0_59] : memref<1x8x32xf32, #tpu.memory_space<vmem>>, vector<1x8x32xf32>
    %122 = vector.shape_cast %121 : vector<1x8x32xf32> to vector<8x32xf32>
    %123 = vector.shape_cast %120 : vector<8x32xf32> to vector<1x8x32xf32>
    tpu.vector_store %arg13[%c0_57, %c0_58, %c0_59], %123 {strides = array<i32>} : memref<1x8x32xf32, #tpu.memory_space<vmem>>, vector<1x8x32xf32>,
    return
  }
  func.func @transform_0(%arg0: i32) -> (i32, i32, i32) {
    %c0_i32 = arith.constant 0 : i32
    %c0_i32_0 = arith.constant 0 : i32
    %c0_i32_1 = arith.constant 0 : i32
    return %arg0, %c0_i32, %c0_i32_0 : i32, i32, i32
  }
  func.func @transform_1(%arg0: i32) -> (i32, i32, i32) {
    %c0_i32 = arith.constant 0 : i32
    %c0_i32_0 = arith.constant 0 : i32
    %c0_i32_1 = arith.constant 0 : i32
    return %arg0, %c0_i32, %c0_i32_0 : i32, i32, i32
  }
  func.func @transform_2(%arg0: i32) -> (i32, i32, i32) {
    %c0_i32 = arith.constant 0 : i32
    %c0_i32_0 = arith.constant 0 : i32
    %c0_i32_1 = arith.constant 0 : i32
    return %arg0, %c0_i32, %c0_i32_0 : i32, i32, i32
  }
  func.func @transform_3(%arg0: i32) -> (i32, i32, i32) {
    %c0_i32 = arith.constant 0 : i32
    %c0_i32_0 = arith.constant 0 : i32
    %c0_i32_1 = arith.constant 0 : i32
    return %arg0, %c0_i32, %c0_i32_0 : i32, i32, i32
  }
  func.func @transform_4(%arg0: i32) -> (i32, i32) {
    %c0_i32 = arith.constant 0 : i32
    %c0_i32_0 = arith.constant 0 : i32
    %c0_i32_1 = arith.constant 0 : i32
    return %c0_i32, %c0_i32_0 : i32, i32
  }
  func.func @transform_5(%arg0: i32) -> (i32, i32) {
    %c0_i32 = arith.constant 0 : i32
    %c0_i32_0 = arith.constant 0 : i32
    %c0_i32_1 = arith.constant 0 : i32
    return %c0_i32, %c0_i32_0 : i32, i32
  }
  func.func @transform_6(%arg0: i32) -> (i32, i32) {
    %c0_i32 = arith.constant 0 : i32
    %c0_i32_0 = arith.constant 0 : i32
    %c0_i32_1 = arith.constant 0 : i32
    return %c0_i32, %c0_i32_0 : i32, i32
  }
  func.func @transform_7(%arg0: i32) -> (i32, i32) {
    %c0_i32 = arith.constant 0 : i32
    %c0_i32_0 = arith.constant 0 : i32
    %c0_i32_1 = arith.constant 0 : i32
    return %c0_i32, %c0_i32_0 : i32, i32
  }
  func.func @transform_8(%arg0: i32) -> (i32, i32) {
    %c0_i32 = arith.constant 0 : i32
    %c0_i32_0 = arith.constant 0 : i32
    %c0_i32_1 = arith.constant 0 : i32
    return %c0_i32, %c0_i32_0 : i32, i32
  }
  func.func @transform_9(%arg0: i32) -> (i32, i32) {
    %c0_i32 = arith.constant 0 : i32
    %c0_i32_0 = arith.constant 0 : i32
    %c0_i32_1 = arith.constant 0 : i32
    return %c0_i32, %c0_i32_0 : i32, i32
  }
  func.func @transform_10(%arg0: i32) -> (i32, i32) {
    %c0_i32 = arith.constant 0 : i32
    %c0_i32_0 = arith.constant 0 : i32
    %c0_i32_1 = arith.constant 0 : i32
    return %c0_i32, %c0_i32_0 : i32, i32
  }
  func.func @transform_11(%arg0: i32) -> (i32, i32) {
    %c0_i32 = arith.constant 0 : i32
    %c0_i32_0 = arith.constant 0 : i32
    %c0_i32_1 = arith.constant 0 : i32
    return %c0_i32, %c0_i32_0 : i32, i32
  }
  func.func @transform_12(%arg0: i32) -> (i32, i32, i32) {
    %c0_i32 = arith.constant 0 : i32
    %c0_i32_0 = arith.constant 0 : i32
    %c0_i32_1 = arith.constant 0 : i32
    return %arg0, %c0_i32, %c0_i32_0 : i32, i32, i32
  }
}

</mosaic_0001>

<llo_original>
// kernel: tpu_custom_call.1
$region0: #{tpu_custom_call.1}
  #allocation0 [shape = 'u32[]', space=smem, size = 0x4, offset = 0x4, fixed_abs, tag = 'smem constant byte address 0x4 - core index']
  #allocation1 [shape = 'u32[144,128]{1,0:T(1,128)}', space=vmem, size = 0x12000, scoped, tag = 'internal scratch']
  %s0 = inlined_call_operand.hbm [shape: f32[2,8,32], index: 0, kind: input, shape index: {}]
  %s1 = inlined_call_operand.hbm [shape: f32[2,8,32], index: 1, kind: input, shape index: {}]
  %s2 = inlined_call_operand.hbm [shape: f32[2,8,32], index: 2, kind: input, shape index: {}]
  %s3 = inlined_call_operand.vmem [shape: s32[2,1,8], index: 3, kind: input, shape index: {}]
  %s4 = inlined_call_operand.hbm [shape: f32[32,32], index: 4, kind: input, shape index: {}]
  %s5 = inlined_call_operand.vmem [shape: f32[1,32], index: 5, kind: input, shape index: {}]
  %s6 = inlined_call_operand.hbm [shape: f32[32,32], index: 6, kind: input, shape index: {}]
  %s7 = inlined_call_operand.vmem [shape: f32[1,32], index: 7, kind: input, shape index: {}]
  %s8 = inlined_call_operand.hbm [shape: f32[32,32], index: 8, kind: input, shape index: {}]
  %s9 = inlined_call_operand.vmem [shape: f32[1,32], index: 9, kind: input, shape index: {}]
  %s10 = inlined_call_operand.vmem [shape: f32[32,32], index: 10, kind: input, shape index: {}]
  %s11 = inlined_call_operand.vmem [shape: f32[1,32], index: 11, kind: input, shape index: {}]
  %s12 = inlined_call_operand.hbm [shape: f32[2,8,32], index: 12, kind: output, shape index: {}]
  %s13 = sld [smem:[#allocation0]]
  $region105: #{tpu_custom_call.1} parent=0
    _
  %s15 = ssub.s32 1, %s13
  %s16 = scalar_select 0, %s15, %s13
  $region1: #{tpu_custom_call.1} parent=0
    #allocation2 [shape = 'u8[8192]{0}', space=vmem, size = 0x2000, scoped, tag = 'input window, operand 0']
    #allocation3 [shape = 's32[2]{0}', space=sflag, size = 0x8, scoped, tag = 'scoped memory for tpu_custom_call.1']
    #allocation4 [shape = 's32[2]{0}', space=sflag, size = 0x8, scoped, tag = 'scoped memory for tpu_custom_call.1']
    #allocation5 [shape = 'u8[8192]{0}', space=vmem, size = 0x2000, scoped, tag = 'input window, operand 1']
    #allocation6 [shape = 's32[2]{0}', space=sflag, size = 0x8, scoped, tag = 'scoped memory for tpu_custom_call.1']
    #allocation7 [shape = 'u8[8192]{0}', space=vmem, size = 0x2000, scoped, tag = 'input window, operand 2']
    #allocation8 [shape = 'u8[16384]{0}', space=vmem, size = 0x4000, scoped, tag = 'input window, operand 4, single buffered']
    #allocation9 [shape = 's32[1]{0}', space=sflag, size = 0x4, scoped, tag = 'scoped memory for tpu_custom_call.1']
    #allocation10 [shape = 'u8[16384]{0}', space=vmem, size = 0x4000, scoped, tag = 'input window, operand 6, single buffered']
    #allocation11 [shape = 'u8[16384]{0}', space=vmem, size = 0x4000, scoped, tag = 'input window, operand 8, single buffered']
    #allocation12 [shape = 's32[1]{0}', space=sflag, size = 0x4, scoped, tag = 'scoped memory for tpu_custom_call.1']
    #allocation13 [shape = 'u8[8192]{0}', space=vmem, size = 0x2000, scoped, tag = 'output window, operand 0']
    %17 = vsyncpa [#allocation3], 0
    %s18 = scalar_lea.sflag [#allocation3], 1
    %19 = vsyncpa %s18, 0
    %20 = vsyncpa [#allocation6], 0
    %s21 = scalar_lea.sflag [#allocation6], 1
    %22 = vsyncpa %s21, 0
    %23 = vsyncpa [#allocation9], 0
    %24 = vsyncpa [#allocation12], 0
    %25 = vsyncpa [#allocation4], 0
    %s26 = scalar_lea.sflag [#allocation4], 1
    %27 = vsyncpa %s26, 0
    loop: start=0, step=1, limit=4
    $region2: #{tpu_custom_call.1} parent=1 // loop_pre_header
      _
    $region3: #{tpu_custom_call.1} parent=1 // loop_header
      %s29 = sphi 0, %s33
      %p30 = scmp.ge.s32.totalorder %s29, 4
      %s39 = sphi 0, %s41
      %s42 = sphi 0, %s39
      %s43 = sphi 0, %s42
      %s59 = sphi 0, %s43
      %s65 = sphi 0, %s67
      %s68 = sphi 0, %s65
      %s69 = sphi 0, %s68
      %s85 = sphi 0, %s69
      %s91 = sphi 0, %s93
      %s94 = sphi 0, %s91
      %s95 = sphi 0, %s94
      %s111 = sphi 0, %s95
      %s117 = sphi 0, %s119
      %s120 = sphi 0, %s117
      %s121 = sphi 0, %s120
      %s137 = sphi 0, %s121
      %s141 = sphi 0, %s141
      %s143 = sphi 0, %s141
      %s144 = sphi 0, %s143
      %s158 = sphi 0, %s144
      %s162 = sphi 0, %s162
      %s164 = sphi 0, %s162
      %s165 = sphi 0, %s164
      %s179 = sphi 0, %s165
      %s183 = sphi 0, %s183
      %s185 = sphi 0, %s183
      %s186 = sphi 0, %s185
      %s200 = sphi 0, %s186
      %s204 = sphi 0, %s204
      %s206 = sphi 0, %s204
      %s207 = sphi 0, %s206
      %s221 = sphi 0, %s207
      %s225 = sphi 0, %s225
      %s227 = sphi 0, %s225
      %s228 = sphi 0, %s227
      %s242 = sphi 0, %s228
      %s246 = sphi 0, %s246
      %s248 = sphi 0, %s246
      %s249 = sphi 0, %s248
      %s263 = sphi 0, %s249
      %s267 = sphi 0, %s267
      %s269 = sphi 0, %s267
      %s270 = sphi 0, %s269
      %s284 = sphi 0, %s270
      %s288 = sphi 0, %s288
      %s290 = sphi 0, %s288
      %s291 = sphi 0, %s290
      %s305 = sphi 0, %s291
      %s311 = sphi 0, %s313
      %s314 = sphi 0, %s311
      %s315 = sphi 0, %s314
      %s331 = sphi 0, %s315
    $region4: #{tpu_custom_call.1} parent=1 // loop_header_branch
      %32 = sbr.rel (%p30) target = $region8
    $region5: #{tpu_custom_call.1} parent=1 // loop_body
      %s34 = ssub.s32 %s29, 1
      %s35 = ssub.s32 %s29, 2
      %s36 = sadd.s32 %s29, 1
      %s37 = ssub.s32 %s29, %s36
      %p38 = scmp.eq.s32.totalorder %s37, 0
      %s40 = sadd.s32 %s39, 1
      %s41 = scalar_select %p38, %s39, %s40
      %p44 = pneg %p38
      %p45 = scmp.eq.s32.totalorder %s29, 1
      %p46 = por %p44, %p45
      %p47 = scmp.ne.s32.totalorder %s39, %s42
      %p48 = scmp.eq.s32.totalorder %s29, 0
      %p49 = por %p47, %p48
      %p50 = scmp.ne.s32.totalorder %s39, %s42
      %p51 = scmp.eq.s32.totalorder %s34, 1
      %p52 = por %p50, %p51
      %p53 = scmp.ne.s32.totalorder %s42, %s43
      %p54 = scmp.eq.s32.totalorder %s34, 0
      %p55 = por %p53, %p54
      %p56 = scmp.ne.s32.totalorder %s42, %s43
      %p57 = scmp.eq.s32.totalorder %s35, 1
      %p58 = por %p56, %p57
      %p60 = scmp.ne.s32.totalorder %s43, %s59
      %p61 = scmp.eq.s32.totalorder %s35, 0
      %p62 = por %p60, %p61
      %s63 = ssub.s32 %s29, %s36
      %p64 = scmp.eq.s32.totalorder %s63, 0
      %s66 = sadd.s32 %s65, 1
      %s67 = scalar_select %p64, %s65, %s66
      %p70 = pneg %p64
      %p71 = scmp.eq.s32.totalorder %s29, 1
      %p72 = por %p70, %p71
      %p73 = scmp.ne.s32.totalorder %s65, %s68
      %p74 = scmp.eq.s32.totalorder %s29, 0
      %p75 = por %p73, %p74
      %p76 = scmp.ne.s32.totalorder %s65, %s68
      %p77 = scmp.eq.s32.totalorder %s34, 1
      %p78 = por %p76, %p77
      %p79 = scmp.ne.s32.totalorder %s68, %s69
      %p80 = scmp.eq.s32.totalorder %s34, 0
      %p81 = por %p79, %p80
      %p82 = scmp.ne.s32.totalorder %s68, %s69
      %p83 = scmp.eq.s32.totalorder %s35, 1
      %p84 = por %p82, %p83
      %p86 = scmp.ne.s32.totalorder %s69, %s85
      %p87 = scmp.eq.s32.totalorder %s35, 0
      %p88 = por %p86, %p87
      %s89 = ssub.s32 %s29, %s36
      %p90 = scmp.eq.s32.totalorder %s89, 0
      %s92 = sadd.s32 %s91, 1
      %s93 = scalar_select %p90, %s91, %s92
      %p96 = pneg %p90
      %p97 = scmp.eq.s32.totalorder %s29, 1
      %p98 = por %p96, %p97
      %p99 = scmp.ne.s32.totalorder %s91, %s94
      %p100 = scmp.eq.s32.totalorder %s29, 0
      %p101 = por %p99, %p100
      %p102 = scmp.ne.s32.totalorder %s91, %s94
      %p103 = scmp.eq.s32.totalorder %s34, 1
      %p104 = por %p102, %p103
      %p105 = scmp.ne.s32.totalorder %s94, %s95
      %p106 = scmp.eq.s32.totalorder %s34, 0
      %p107 = por %p105, %p106
      %p108 = scmp.ne.s32.totalorder %s94, %s95
      %p109 = scmp.eq.s32.totalorder %s35, 1
      %p110 = por %p108, %p109
      %p112 = scmp.ne.s32.totalorder %s95, %s111
      %p113 = scmp.eq.s32.totalorder %s35, 0
      %p114 = por %p112, %p113
      %s115 = ssub.s32 %s29, %s36
      %p116 = scmp.eq.s32.totalorder %s115, 0
      %s118 = sadd.s32 %s117, 1
      %s119 = scalar_select %p116, %s117, %s118
      %p122 = pneg %p116
      %p123 = scmp.eq.s32.totalorder %s29, 1
      %p124 = por %p122, %p123
      %p125 = scmp.ne.s32.totalorder %s117, %s120
      %p126 = scmp.eq.s32.totalorder %s29, 0
      %p127 = por %p125, %p126
      %p128 = scmp.ne.s32.totalorder %s117, %s120
      %p129 = scmp.eq.s32.totalorder %s34, 1
      %p130 = por %p128, %p129
      %p131 = scmp.ne.s32.totalorder %s120, %s121
      %p132 = scmp.eq.s32.totalorder %s34, 0
      %p133 = por %p131, %p132
      %p134 = scmp.ne.s32.totalorder %s120, %s121
      %p135 = scmp.eq.s32.totalorder %s35, 1
      %p136 = por %p134, %p135
      %p138 = scmp.ne.s32.totalorder %s121, %s137
      %p139 = scmp.eq.s32.totalorder %s35, 0
      %p140 = por %p138, %p139
      %s142 = sadd.s32 %s141, 1
      %p145 = scmp.eq.s32.totalorder %s29, 1
      %p146 = scmp.ne.s32.totalorder %s141, %s143
      %p147 = scmp.eq.s32.totalorder %s29, 0
      %p148 = por %p146, %p147
      %p149 = scmp.ne.s32.totalorder %s141, %s143
      %p150 = scmp.eq.s32.totalorder %s34, 1
      %p151 = por %p149, %p150
      %p152 = scmp.ne.s32.totalorder %s143, %s144
      %p153 = scmp.eq.s32.totalorder %s34, 0
      %p154 = por %p152, %p153
      %p155 = scmp.ne.s32.totalorder %s143, %s144
      %p156 = scmp.eq.s32.totalorder %s35, 1
      %p157 = por %p155, %p156
      %p159 = scmp.ne.s32.totalorder %s144, %s158
      %p160 = scmp.eq.s32.totalorder %s35, 0
      %p161 = por %p159, %p160
      %s163 = sadd.s32 %s162, 1
      %p166 = scmp.eq.s32.totalorder %s29, 1
      %p167 = scmp.ne.s32.totalorder %s162, %s164
      %p168 = scmp.eq.s32.totalorder %s29, 0
      %p169 = por %p167, %p168
      %p170 = scmp.ne.s32.totalorder %s162, %s164
      %p171 = scmp.eq.s32.totalorder %s34, 1
      %p172 = por %p170, %p171
      %p173 = scmp.ne.s32.totalorder %s164, %s165
      %p174 = scmp.eq.s32.totalorder %s34, 0
      %p175 = por %p173, %p174
      %p176 = scmp.ne.s32.totalorder %s164, %s165
      %p177 = scmp.eq.s32.totalorder %s35, 1
      %p178 = por %p176, %p177
      %p180 = scmp.ne.s32.totalorder %s165, %s179
      %p181 = scmp.eq.s32.totalorder %s35, 0
      %p182 = por %p180, %p181
      %s184 = sadd.s32 %s183, 1
      %p187 = scmp.eq.s32.totalorder %s29, 1
      %p188 = scmp.ne.s32.totalorder %s183, %s185
      %p189 = scmp.eq.s32.totalorder %s29, 0
      %p190 = por %p188, %p189
      %p191 = scmp.ne.s32.totalorder %s183, %s185
      %p192 = scmp.eq.s32.totalorder %s34, 1
      %p193 = por %p191, %p192
      %p194 = scmp.ne.s32.totalorder %s185, %s186
      %p195 = scmp.eq.s32.totalorder %s34, 0
      %p196 = por %p194, %p195
      %p197 = scmp.ne.s32.totalorder %s185, %s186
      %p198 = scmp.eq.s32.totalorder %s35, 1
      %p199 = por %p197, %p198
      %p201 = scmp.ne.s32.totalorder %s186, %s200
      %p202 = scmp.eq.s32.totalorder %s35, 0
      %p203 = por %p201, %p202
      %s205 = sadd.s32 %s204, 1
      %p208 = scmp.eq.s32.totalorder %s29, 1
      %p209 = scmp.ne.s32.totalorder %s204, %s206
      %p210 = scmp.eq.s32.totalorder %s29, 0
      %p211 = por %p209, %p210
      %p212 = scmp.ne.s32.totalorder %s204, %s206
      %p213 = scmp.eq.s32.totalorder %s34, 1
      %p214 = por %p212, %p213
      %p215 = scmp.ne.s32.totalorder %s206, %s207
      %p216 = scmp.eq.s32.totalorder %s34, 0
      %p217 = por %p215, %p216
      %p218 = scmp.ne.s32.totalorder %s206, %s207
      %p219 = scmp.eq.s32.totalorder %s35, 1
      %p220 = por %p218, %p219
      %p222 = scmp.ne.s32.totalorder %s207, %s221
      %p223 = scmp.eq.s32.totalorder %s35, 0
      %p224 = por %p222, %p223
      %s226 = sadd.s32 %s225, 1
      %p229 = scmp.eq.s32.totalorder %s29, 1
      %p230 = scmp.ne.s32.totalorder %s225, %s227
      %p231 = scmp.eq.s32.totalorder %s29, 0
      %p232 = por %p230, %p231
      %p233 = scmp.ne.s32.totalorder %s225, %s227
      %p234 = scmp.eq.s32.totalorder %s34, 1
      %p235 = por %p233, %p234
      %p236 = scmp.ne.s32.totalorder %s227, %s228
      %p237 = scmp.eq.s32.totalorder %s34, 0
      %p238 = por %p236, %p237
      %p239 = scmp.ne.s32.totalorder %s227, %s228
      %p240 = scmp.eq.s32.totalorder %s35, 1
      %p241 = por %p239, %p240
      %p243 = scmp.ne.s32.totalorder %s228, %s242
      %p244 = scmp.eq.s32.totalorder %s35, 0
      %p245 = por %p243, %p244
      %s247 = sadd.s32 %s246, 1
      %p250 = scmp.eq.s32.totalorder %s29, 1
      %p251 = scmp.ne.s32.totalorder %s246, %s248
      %p252 = scmp.eq.s32.totalorder %s29, 0
      %p253 = por %p251, %p252
      %p254 = scmp.ne.s32.totalorder %s246, %s248
      %p255 = scmp.eq.s32.totalorder %s34, 1
      %p256 = por %p254, %p255
      %p257 = scmp.ne.s32.totalorder %s248, %s249
      %p258 = scmp.eq.s32.totalorder %s34, 0
      %p259 = por %p257, %p258
      %p260 = scmp.ne.s32.totalorder %s248, %s249
      %p261 = scmp.eq.s32.totalorder %s35, 1
      %p262 = por %p260, %p261
      %p264 = scmp.ne.s32.totalorder %s249, %s263
      %p265 = scmp.eq.s32.totalorder %s35, 0
      %p266 = por %p264, %p265
      %s268 = sadd.s32 %s267, 1
      %p271 = scmp.eq.s32.totalorder %s29, 1
      %p272 = scmp.ne.s32.totalorder %s267, %s269
      %p273 = scmp.eq.s32.totalorder %s29, 0
      %p274 = por %p272, %p273
      %p275 = scmp.ne.s32.totalorder %s267, %s269
      %p276 = scmp.eq.s32.totalorder %s34, 1
      %p277 = por %p275, %p276
      %p278 = scmp.ne.s32.totalorder %s269, %s270
      %p279 = scmp.eq.s32.totalorder %s34, 0
      %p280 = por %p278, %p279
      %p281 = scmp.ne.s32.totalorder %s269, %s270
      %p282 = scmp.eq.s32.totalorder %s35, 1
      %p283 = por %p281, %p282
      %p285 = scmp.ne.s32.totalorder %s270, %s284
      %p286 = scmp.eq.s32.totalorder %s35, 0
      %p287 = por %p285, %p286
      %s289 = sadd.s32 %s288, 1
      %p292 = scmp.eq.s32.totalorder %s29, 1
      %p293 = scmp.ne.s32.totalorder %s288, %s290
      %p294 = scmp.eq.s32.totalorder %s29, 0
      %p295 = por %p293, %p294
      %p296 = scmp.ne.s32.totalorder %s288, %s290
      %p297 = scmp.eq.s32.totalorder %s34, 1
      %p298 = por %p296, %p297
      %p299 = scmp.ne.s32.totalorder %s290, %s291
      %p300 = scmp.eq.s32.totalorder %s34, 0
      %p301 = por %p299, %p300
      %p302 = scmp.ne.s32.totalorder %s290, %s291
      %p303 = scmp.eq.s32.totalorder %s35, 1
      %p304 = por %p302, %p303
      %p306 = scmp.ne.s32.totalorder %s291, %s305
      %p307 = scmp.eq.s32.totalorder %s35, 0
      %p308 = por %p306, %p307
      %s309 = ssub.s32 %s29, %s36
      %p310 = scmp.eq.s32.totalorder %s309, 0
      %s312 = sadd.s32 %s311, 1
      %s313 = scalar_select %p310, %s311, %s312
      %p316 = pneg %p310
      %p317 = scmp.eq.s32.totalorder %s29, 1
      %p318 = por %p316, %p317
      %p319 = scmp.ne.s32.totalorder %s311, %s314
      %p320 = scmp.eq.s32.totalorder %s29, 0
      %p321 = por %p319, %p320
      %p322 = scmp.ne.s32.totalorder %s311, %s314
      %p323 = scmp.eq.s32.totalorder %s34, 1
      %p324 = por %p322, %p323
      %p325 = scmp.ne.s32.totalorder %s314, %s315
      %p326 = scmp.eq.s32.totalorder %s34, 0
      %p327 = por %p325, %p326
      %p328 = scmp.ne.s32.totalorder %s314, %s315
      %p329 = scmp.eq.s32.totalorder %s35, 1
      %p330 = por %p328, %p329
      %p332 = scmp.ne.s32.totalorder %s315, %s331
      %p333 = scmp.eq.s32.totalorder %s35, 0
      %p334 = por %p332, %p333
      %p335 = scmp.le.s32.totalorder 1, %s29
      %p336 = scmp.lt.s32.totalorder %s29, 3
      %p337 = pnand %p335, %p336
      %p338 = pneg %p337
      // Predicated region
      $region9: #{tpu_custom_call.1} parent=5 // pred_check
        _
      $region10: #{tpu_custom_call.1} parent=5 // pred_check_branch
        %340 = sbr.rel (%p337) target = $region12
      $region11: #{tpu_custom_call.1} parent=5 // pred_region
        %s341 = ssub.s32 %s29, 1
        // Predicated region
        $region13: #{tpu_custom_call.1} parent=11 // pred_check
          %p342 = pneg %p154
        $region14: #{tpu_custom_call.1} parent=11 // pred_check_branch
          %344 = sbr.rel (%p342) target = $region16
        $region15: #{tpu_custom_call.1} parent=11 // pred_region
          %s346 = ssub.s32 512, 512
          %347 = vsyncadd [#allocation9], %s346
          %s348 = sshll.u32 [#allocation8], 4
          %s349 = int_to_ptr.vmem [resolvable:$true] %s348
          %354 = dma.hbm_to_vmem [thread:$0]  %s4, 512, %s349, [#allocation9], 128, 128, 8
        $region16: #{tpu_custom_call.1} parent=11 // pred_fallthru
          _
        // Predicated region
        $region17: #{tpu_custom_call.1} parent=11 // pred_check
          %p355 = pneg %p175
        $region18: #{tpu_custom_call.1} parent=11 // pred_check_branch
          %357 = sbr.rel (%p355) target = $region20
        $region19: #{tpu_custom_call.1} parent=11 // pred_region
          _
        $region20: #{tpu_custom_call.1} parent=11 // pred_fallthru
          _
        // Predicated region
        $region21: #{tpu_custom_call.1} parent=11 // pred_check
          %p358 = pneg %p196
        $region22: #{tpu_custom_call.1} parent=11 // pred_check_branch
          %360 = sbr.rel (%p358) target = $region24
        $region23: #{tpu_custom_call.1} parent=11 // pred_region
          %s362 = ssub.s32 512, 512
          %363 = vsyncadd [#allocation9], %s362
          %s364 = sshll.u32 [#allocation10], 4
          %s365 = int_to_ptr.vmem [resolvable:$true] %s364
          %370 = dma.hbm_to_vmem [thread:$0]  %s6, 512, %s365, [#allocation9], 128, 128, 8
        $region24: #{tpu_custom_call.1} parent=11 // pred_fallthru
          _
        // Predicated region
        $region25: #{tpu_custom_call.1} parent=11 // pred_check
          %p371 = pneg %p217
        $region26: #{tpu_custom_call.1} parent=11 // pred_check_branch
          %373 = sbr.rel (%p371) target = $region28
        $region27: #{tpu_custom_call.1} parent=11 // pred_region
          _
        $region28: #{tpu_custom_call.1} parent=11 // pred_fallthru
          _
        // Predicated region
        $region29: #{tpu_custom_call.1} parent=11 // pred_check
          %p374 = pneg %p238
        $region30: #{tpu_custom_call.1} parent=11 // pred_check_branch
          %376 = sbr.rel (%p374) target = $region32
        $region31: #{tpu_custom_call.1} parent=11 // pred_region
          %s378 = ssub.s32 512, 512
          %379 = vsyncadd [#allocation12], %s378
          %s380 = sshll.u32 [#allocation11], 4
          %s381 = int_to_ptr.vmem [resolvable:$true] %s380
          %386 = dma.hbm_to_vmem [thread:$0]  %s8, 512, %s381, [#allocation12], 128, 128, 8
        $region32: #{tpu_custom_call.1} parent=11 // pred_fallthru
          _
        // Predicated region
        $region33: #{tpu_custom_call.1} parent=11 // pred_check
          %p387 = pneg %p259
        $region34: #{tpu_custom_call.1} parent=11 // pred_check_branch
          %389 = sbr.rel (%p387) target = $region36
        $region35: #{tpu_custom_call.1} parent=11 // pred_region
          _
        $region36: #{tpu_custom_call.1} parent=11 // pred_fallthru
          _
        // Predicated region
        $region37: #{tpu_custom_call.1} parent=11 // pred_check
          %p390 = pneg %p280
        $region38: #{tpu_custom_call.1} parent=11 // pred_check_branch
          %392 = sbr.rel (%p390) target = $region40
        $region39: #{tpu_custom_call.1} parent=11 // pred_region
          _
        $region40: #{tpu_custom_call.1} parent=11 // pred_fallthru
          _
        // Predicated region
        $region41: #{tpu_custom_call.1} parent=11 // pred_check
          %p393 = pneg %p301
        $region42: #{tpu_custom_call.1} parent=11 // pred_check_branch
          %395 = sbr.rel (%p393) target = $region44
        $region43: #{tpu_custom_call.1} parent=11 // pred_region
          _
        $region44: #{tpu_custom_call.1} parent=11 // pred_fallthru
          _
      $region12: #{tpu_custom_call.1} parent=5 // pred_fallthru
        _
      %p396 = scmp.lt.s32.totalorder %s29, 2
      // Predicated region
      $region45: #{tpu_custom_call.1} parent=5 // pred_check
        %p397 = pneg %p396
      $region46: #{tpu_custom_call.1} parent=5 // pred_check_branch
        %399 = sbr.rel (%p397) target = $region48
      $region47: #{tpu_custom_call.1} parent=5 // pred_region
        // Predicated region
        $region49: #{tpu_custom_call.1} parent=47 // pred_check
          %p400 = pneg %p49
        $region50: #{tpu_custom_call.1} parent=47 // pred_check_branch
          %402 = sbr.rel (%p400) target = $region52
        $region51: #{tpu_custom_call.1} parent=47 // pred_region
          %s403 = sand.u32 %s39, 1
          %s404 = scalar_lea.sflag [#allocation3], %s403
          %s405 = sand.u32 %s39, 1
          %s406 = smul.addr %s405, 8
          %s407 = scalar_lea.vmem [#allocation2], %s406
          %s409 = ssub.s32 128, 128
          %410 = vsyncadd %s404, %s409
          %s411 = smul.addr %s29, 128
          %s412 = scalar_lea.hbm %s0, %s411
          %s414 = sshll.u32 %s407, 4
          %s415 = int_to_ptr.vmem [resolvable:$true] %s414
          %417 = dma.hbm_to_vmem [thread:$0]  %s412, 128, %s415, %s404
        $region52: #{tpu_custom_call.1} parent=47 // pred_fallthru
          _
        // Predicated region
        $region53: #{tpu_custom_call.1} parent=47 // pred_check
          %p418 = pneg %p75
        $region54: #{tpu_custom_call.1} parent=47 // pred_check_branch
          %420 = sbr.rel (%p418) target = $region56
        $region55: #{tpu_custom_call.1} parent=47 // pred_region
          %s421 = sand.u32 %s29, 1
          %s422 = scalar_lea.sflag [#allocation6], %s421
          %s423 = sand.u32 %s65, 1
          %s424 = smul.addr %s423, 8
          %s425 = scalar_lea.vmem [#allocation5], %s424
          %s427 = ssub.s32 128, 128
          %428 = vsyncadd %s422, %s427
          %s429 = smul.addr %s29, 128
          %s430 = scalar_lea.hbm %s1, %s429
          %s432 = sshll.u32 %s425, 4
          %s433 = int_to_ptr.vmem [resolvable:$true] %s432
          %435 = dma.hbm_to_vmem [thread:$0]  %s430, 128, %s433, %s422
        $region56: #{tpu_custom_call.1} parent=47 // pred_fallthru
          _
        // Predicated region
        $region57: #{tpu_custom_call.1} parent=47 // pred_check
          %p436 = pneg %p101
        $region58: #{tpu_custom_call.1} parent=47 // pred_check_branch
          %438 = sbr.rel (%p436) target = $region60
        $region59: #{tpu_custom_call.1} parent=47 // pred_region
          %s439 = sand.u32 %s29, 1
          %s440 = scalar_lea.sflag [#allocation6], %s439
          %s441 = sand.u32 %s91, 1
          %s442 = smul.addr %s441, 8
          %s443 = scalar_lea.vmem [#allocation7], %s442
          %s445 = ssub.s32 128, 128
          %446 = vsyncadd %s440, %s445
          %s447 = smul.addr %s29, 128
          %s448 = scalar_lea.hbm %s2, %s447
          %s450 = sshll.u32 %s443, 4
          %s451 = int_to_ptr.vmem [resolvable:$true] %s450
          %453 = dma.hbm_to_vmem [thread:$0]  %s448, 128, %s451, %s440
        $region60: #{tpu_custom_call.1} parent=47 // pred_fallthru
          _
        // Predicated region
        $region61: #{tpu_custom_call.1} parent=47 // pred_check
          %p454 = pneg %p127
        $region62: #{tpu_custom_call.1} parent=47 // pred_check_branch
          %456 = sbr.rel (%p454) target = $region64
        $region63: #{tpu_custom_call.1} parent=47 // pred_region
          %p457 = scmp.lt.s32.totalorder %s29, 1
          %s458 = scalar_select %p457, %s29, 1
          %s459 = scalar_lea.vmem %s3, %s458
        $region64: #{tpu_custom_call.1} parent=47 // pred_fallthru
          _
      $region48: #{tpu_custom_call.1} parent=5 // pred_fallthru
        _
      %p460 = scmp.le.s32.totalorder 1, %s29
      %p461 = scmp.lt.s32.totalorder %s29, 3
      %p462 = pnand %p460, %p461
      %p463 = pneg %p462
      // Predicated region
      $region65: #{tpu_custom_call.1} parent=5 // pred_check
        _
      $region66: #{tpu_custom_call.1} parent=5 // pred_check_branch
        %465 = sbr.rel (%p462) target = $region68
      $region67: #{tpu_custom_call.1} parent=5 // pred_region
        %s466 = ssub.s32 %s29, 1
        %s467 = sand.u32 %s42, 1
        %s468 = scalar_lea.sflag [#allocation3], %s467
        %s469 = sand.u32 %s42, 1
        %s470 = smul.addr %s469, 8
        %s471 = scalar_lea.vmem [#allocation2], %s470
        // Predicated region
        $region69: #{tpu_custom_call.1} parent=67 // pred_check
          %p472 = pneg %p55
        $region70: #{tpu_custom_call.1} parent=67 // pred_check_branch
          %474 = sbr.rel (%p472) target = $region72
        $region71: #{tpu_custom_call.1} parent=67 // pred_region
          %475 = dma.done %s468, 128
        $region72: #{tpu_custom_call.1} parent=67 // pred_fallthru
          _
        %s476 = sand.u32 %s34, 1
        %s477 = scalar_lea.sflag [#allocation6], %s476
        %s478 = sand.u32 %s68, 1
        %s479 = smul.addr %s478, 8
        %s480 = scalar_lea.vmem [#allocation5], %s479
        // Predicated region
        $region73: #{tpu_custom_call.1} parent=67 // pred_check
          %p481 = pneg %p81
        $region74: #{tpu_custom_call.1} parent=67 // pred_check_branch
          %483 = sbr.rel (%p481) target = $region76
        $region75: #{tpu_custom_call.1} parent=67 // pred_region
          %484 = dma.done %s477, 128
        $region76: #{tpu_custom_call.1} parent=67 // pred_fallthru
          _
        %s485 = sand.u32 %s34, 1
        %s486 = scalar_lea.sflag [#allocation6], %s485
        %s487 = sand.u32 %s94, 1
        %s488 = smul.addr %s487, 8
        %s489 = scalar_lea.vmem [#allocation7], %s488
        // Predicated region
        $region77: #{tpu_custom_call.1} parent=67 // pred_check
          %p490 = pneg %p107
        $region78: #{tpu_custom_call.1} parent=67 // pred_check_branch
          %492 = sbr.rel (%p490) target = $region80
        $region79: #{tpu_custom_call.1} parent=67 // pred_region
          %493 = dma.done %s486, 128
        $region80: #{tpu_custom_call.1} parent=67 // pred_fallthru
          _
        // Predicated region
        $region81: #{tpu_custom_call.1} parent=67 // pred_check
          %p494 = pneg %p154
        $region82: #{tpu_custom_call.1} parent=67 // pred_check_branch
          %496 = sbr.rel (%p494) target = $region84
        $region83: #{tpu_custom_call.1} parent=67 // pred_region
          %497 = dma.done [#allocation9], 512
        $region84: #{tpu_custom_call.1} parent=67 // pred_fallthru
          _
        // Predicated region
        $region85: #{tpu_custom_call.1} parent=67 // pred_check
          %p498 = pneg %p196
        $region86: #{tpu_custom_call.1} parent=67 // pred_check_branch
          %500 = sbr.rel (%p498) target = $region88
        $region87: #{tpu_custom_call.1} parent=67 // pred_region
          %501 = dma.done [#allocation9], 512
        $region88: #{tpu_custom_call.1} parent=67 // pred_fallthru
          _
        // Predicated region
        $region89: #{tpu_custom_call.1} parent=67 // pred_check
          %p502 = pneg %p238
        $region90: #{tpu_custom_call.1} parent=67 // pred_check_branch
          %504 = sbr.rel (%p502) target = $region92
        $region91: #{tpu_custom_call.1} parent=67 // pred_region
          %505 = dma.done [#allocation12], 512
        $region92: #{tpu_custom_call.1} parent=67 // pred_fallthru
          _
        %s506 = sand.u32 %s42, 1
        %s507 = scalar_lea.sflag [#allocation3], %s506
        %s508 = sand.u32 %s42, 1
        %s509 = smul.addr %s508, 8
        %s510 = scalar_lea.vmem [#allocation2], %s509
        %p511 = pneg %p55
        %p512 = pneg %p52
        %s513 = sand.u32 %s34, 1
        %s514 = scalar_lea.sflag [#allocation6], %s513
        %s515 = sand.u32 %s68, 1
        %s516 = smul.addr %s515, 8
        %s517 = scalar_lea.vmem [#allocation5], %s516
        %p518 = pneg %p81
        %p519 = pneg %p78
        %s520 = sand.u32 %s34, 1
        %s521 = scalar_lea.sflag [#allocation6], %s520
        %s522 = sand.u32 %s94, 1
        %s523 = smul.addr %s522, 8
        %s524 = scalar_lea.vmem [#allocation7], %s523
        %p525 = pneg %p107
        %p526 = pneg %p104
        %p527 = scmp.lt.s32.totalorder %s34, 1
        %s528 = scalar_select %p527, %s34, 1
        %s529 = scalar_lea.vmem %s3, %s528
        %p530 = pneg %p133
        %p531 = pneg %p130
        %p532 = pneg %p154
        %p533 = pneg %p151
        %p534 = pneg %p175
        %p535 = pneg %p172
        %p536 = pneg %p196
        %p537 = pneg %p193
        %p538 = pneg %p217
        %p539 = pneg %p214
        %p540 = pneg %p238
        %p541 = pneg %p235
        %p542 = pneg %p259
        %p543 = pneg %p256
        %p544 = pneg %p280
        %p545 = pneg %p277
        %p546 = pneg %p301
        %p547 = pneg %p298
        %p548 = pneg %p327
        %p549 = pneg %p324
        %s550 = sand.u32 %s314, 1
        %s551 = scalar_lea.sflag [#allocation4], %s550
        %s552 = sand.u32 %s314, 1
        %s553 = smul.addr %s552, 8
        %s554 = scalar_lea.vmem [#allocation13], %s553
        %p555 = scmp.lt.s32.totalorder %s34, 1
        %s556 = scalar_select %p555, %s34, 1
        %s557 = scalar_lea.vmem %s3, %s556
        %v558 = vld [vmem:[%s471] sm:$0xff]
        %v559 = vld [vmem:[%s480] sm:$0xff]
        %v560 = vld [vmem:[%s489] sm:$0xff]
        %v561 = vld [vmem:[%s557] sm:$0x1]
        %v562 = vld [vmem:[#allocation8] sm:$0xff]
        %v563 = vld [vmem:[#allocation8 + $0x8] sm:$0xff]
        %v564 = vld [vmem:[#allocation8 + $0x10] sm:$0xff]
        %v565 = vld [vmem:[#allocation8 + $0x18] sm:$0xff]
        %v566 = vld [vmem:[%s5] sm:$0x1]
        %v568 = vlaneseq
        %v569 = vshrl.u32 %v568, 7
        %v570 = vsub.s32 0, %v569
        %v571 = vrot.slane %v566, %v570
        %vm573 = vcmask 261120
        %v575 = vsel %vm573, %v558, 0
        %577 = vmatprep.subr.mxu0 0.0
        %578 = vmatpush1.msra.mxu0 %v562
        %579 = vmatprep.subr.mxu0 0.0
        %580 = vmatpush1.msra.mxu0 %v563
        %581 = vmatprep.subr.mxu0 0.0
        %582 = vmatpush1.msra.mxu0 %v564
        %583 = vmatprep.subr.mxu0 0.0
        %584 = vmatpush1.msra.mxu0 %v565
        %585 = vmatprep.subr.mxu0 0.0
        %586 = vmatpush1.msra.mxu0 0.0
        %587 = vmatprep.subr.mxu0 0.0
        %588 = vmatpush1.msra.mxu0 0.0
        %589 = vmatprep.subr.mxu0 0.0
        %590 = vmatpush1.msra.mxu0 0.0
        %591 = vmatprep.subr.mxu0 0.0
        %592 = vmatpush1.msra.mxu0 0.0
        %593 = vmatprep.subr.mxu0 0.0
        %594 = vmatpush1.msra.mxu0 0.0
        %595 = vmatprep.subr.mxu0 0.0
        %596 = vmatpush1.msra.mxu0 0.0
        %597 = vmatprep.subr.mxu0 0.0
        %598 = vmatpush1.msra.mxu0 0.0
        %599 = vmatprep.subr.mxu0 0.0
        %600 = vmatpush1.msra.mxu0 0.0
        %601 = vmatprep.subr.mxu0 0.0
        %602 = vmatpush1.msra.mxu0 0.0
        %603 = vmatprep.subr.mxu0 0.0
        %604 = vmatpush1.msra.mxu0 0.0
        %605 = vmatprep.subr.mxu0 0.0
        %606 = vmatpush1.msra.mxu0 0.0
        %607 = vmatprep.subr.mxu0 0.0
        %608 = vmatpush1.msra.mxu0 0.0
        %609 = vmatprep.subr.mxu0 0.0
        %610 = vmatpush1.msra.mxu0 0.0
        %611 = vmatprep.subr.mxu0 0.0
        %612 = vmatpush1.msra.mxu0 0.0
        %613 = vmatprep.subr.mxu0 0.0
        %614 = vmatpush1.msra.mxu0 0.0
        %615 = vmatprep.subr.mxu0 0.0
        %616 = vmatpush1.msra.mxu0 0.0
        %617 = vmatprep.subr.mxu0 0.0
        %618 = vmatpush1.msra.mxu0 0.0
        %619 = vmatprep.subr.mxu0 0.0
        %620 = vmatpush1.msra.mxu0 0.0
        %621 = vmatprep.subr.mxu0 0.0
        %622 = vmatpush1.msra.mxu0 0.0
        %623 = vmatprep.subr.mxu0 0.0
        %624 = vmatpush1.msra.mxu0 0.0
        %625 = vmatprep.subr.mxu0 0.0
        %626 = vmatpush1.msra.mxu0 0.0
        %627 = vmatprep.subr.mxu0 0.0
        %628 = vmatpush1.msra.mxu0 0.0
        %629 = vmatprep.subr.mxu0 0.0
        %630 = vmatpush1.msra.mxu0 0.0
        %631 = vmatprep.subr.mxu0 0.0
        %632 = vmatpush1.msra.mxu0 0.0
        %633 = vmatprep.subr.mxu0 0.0
        %634 = vmatpush1.msra.mxu0 0.0
        %635 = vmatprep.subr.mxu0 0.0
        %636 = vmatpush1.msra.mxu0 0.0
        %637 = vmatprep.subr.mxu0 0.0
        %638 = vmatpush1.msra.mxu0 0.0
        %639 = vmatprep.subr.mxu0 0.0
        %640 = vmatpush1.msra.mxu0 0.0
        %641 = vmatprep.mubr.f32.mxu0 0.0
        %642 = vmatmul.mubr.f32.gmra.mrb[0].mxu0 %v575
        %v643 = vpop.f32.mrb[0].mxu0
        %v644 = vadd.f32 %v571, %v643
        %v645 = vpop.f32.mrb[0].mxu0
        %646 = vdwg.mxu0
        %v647 = vld [vmem:[#allocation10] sm:$0xff]
        %v648 = vld [vmem:[#allocation10 + $0x8] sm:$0xff]
        %v649 = vld [vmem:[#allocation10 + $0x10] sm:$0xff]
        %v650 = vld [vmem:[#allocation10 + $0x18] sm:$0xff]
        %v651 = vld [vmem:[%s7] sm:$0x1]
        %v653 = vlaneseq
        %v654 = vshrl.u32 %v653, 7
        %v655 = vsub.s32 0, %v654
        %v656 = vrot.slane %v651, %v655
        %v659 = vsel %vm573, %v559, 0
        %661 = vmatprep.subr.mxu0 0.0
        %662 = vmatpush1.msra.mxu0 %v647
        %663 = vmatprep.subr.mxu0 0.0
        %664 = vmatpush1.msra.mxu0 %v648
        %665 = vmatprep.subr.mxu0 0.0
        %666 = vmatpush1.msra.mxu0 %v649
        %667 = vmatprep.subr.mxu0 0.0
        %668 = vmatpush1.msra.mxu0 %v650
        %669 = vmatprep.subr.mxu0 0.0
        %670 = vmatpush1.msra.mxu0 0.0
        %671 = vmatprep.subr.mxu0 0.0
        %672 = vmatpush1.msra.mxu0 0.0
        %673 = vmatprep.subr.mxu0 0.0
        %674 = vmatpush1.msra.mxu0 0.0
        %675 = vmatprep.subr.mxu0 0.0
        %676 = vmatpush1.msra.mxu0 0.0
        %677 = vmatprep.subr.mxu0 0.0
        %678 = vmatpush1.msra.mxu0 0.0
        %679 = vmatprep.subr.mxu0 0.0
        %680 = vmatpush1.msra.mxu0 0.0
        %681 = vmatprep.subr.mxu0 0.0
        %682 = vmatpush1.msra.mxu0 0.0
        %683 = vmatprep.subr.mxu0 0.0
        %684 = vmatpush1.msra.mxu0 0.0
        %685 = vmatprep.subr.mxu0 0.0
        %686 = vmatpush1.msra.mxu0 0.0
        %687 = vmatprep.subr.mxu0 0.0
        %688 = vmatpush1.msra.mxu0 0.0
        %689 = vmatprep.subr.mxu0 0.0
        %690 = vmatpush1.msra.mxu0 0.0
        %691 = vmatprep.subr.mxu0 0.0
        %692 = vmatpush1.msra.mxu0 0.0
        %693 = vmatprep.subr.mxu0 0.0
        %694 = vmatpush1.msra.mxu0 0.0
        %695 = vmatprep.subr.mxu0 0.0
        %696 = vmatpush1.msra.mxu0 0.0
        %697 = vmatprep.subr.mxu0 0.0
        %698 = vmatpush1.msra.mxu0 0.0
        %699 = vmatprep.subr.mxu0 0.0
        %700 = vmatpush1.msra.mxu0 0.0
        %701 = vmatprep.subr.mxu0 0.0
        %702 = vmatpush1.msra.mxu0 0.0
        %703 = vmatprep.subr.mxu0 0.0
        %704 = vmatpush1.msra.mxu0 0.0
        %705 = vmatprep.subr.mxu0 0.0
        %706 = vmatpush1.msra.mxu0 0.0
        %707 = vmatprep.subr.mxu0 0.0
        %708 = vmatpush1.msra.mxu0 0.0
        %709 = vmatprep.subr.mxu0 0.0
        %710 = vmatpush1.msra.mxu0 0.0
        %711 = vmatprep.subr.mxu0 0.0
        %712 = vmatpush1.msra.mxu0 0.0
        %713 = vmatprep.subr.mxu0 0.0
        %714 = vmatpush1.msra.mxu0 0.0
        %715 = vmatprep.subr.mxu0 0.0
        %716 = vmatpush1.msra.mxu0 0.0
        %717 = vmatprep.subr.mxu0 0.0
        %718 = vmatpush1.msra.mxu0 0.0
        %719 = vmatprep.subr.mxu0 0.0
        %720 = vmatpush1.msra.mxu0 0.0
        %721 = vmatprep.subr.mxu0 0.0
        %722 = vmatpush1.msra.mxu0 0.0
        %723 = vmatprep.subr.mxu0 0.0
        %724 = vmatpush1.msra.mxu0 0.0
        %725 = vmatprep.mubr.f32.mxu0 0.0
        %726 = vmatmul.mubr.f32.gmra.mrb[0].mxu0 %v659
        %v727 = vpop.f32.mrb[0].mxu0
        %v728 = vadd.f32 %v656, %v727
        %v729 = vpop.f32.mrb[0].mxu0
        %730 = vdwg.mxu0
        %v731 = vld [vmem:[#allocation11] sm:$0xff]
        %v732 = vld [vmem:[#allocation11 + $0x8] sm:$0xff]
        %v733 = vld [vmem:[#allocation11 + $0x10] sm:$0xff]
        %v734 = vld [vmem:[#allocation11 + $0x18] sm:$0xff]
        %v735 = vld [vmem:[%s9] sm:$0x1]
        %v737 = vlaneseq
        %v738 = vshrl.u32 %v737, 7
        %v739 = vsub.s32 0, %v738
        %v740 = vrot.slane %v735, %v739
        %v743 = vsel %vm573, %v560, 0
        %745 = vmatprep.subr.mxu0 0.0
        %746 = vmatpush1.msra.mxu0 %v731
        %747 = vmatprep.subr.mxu0 0.0
        %748 = vmatpush1.msra.mxu0 %v732
        %749 = vmatprep.subr.mxu0 0.0
        %750 = vmatpush1.msra.mxu0 %v733
        %751 = vmatprep.subr.mxu0 0.0
        %752 = vmatpush1.msra.mxu0 %v734
        %753 = vmatprep.subr.mxu0 0.0
        %754 = vmatpush1.msra.mxu0 0.0
        %755 = vmatprep.subr.mxu0 0.0
        %756 = vmatpush1.msra.mxu0 0.0
        %757 = vmatprep.subr.mxu0 0.0
        %758 = vmatpush1.msra.mxu0 0.0
        %759 = vmatprep.subr.mxu0 0.0
        %760 = vmatpush1.msra.mxu0 0.0
        %761 = vmatprep.subr.mxu0 0.0
        %762 = vmatpush1.msra.mxu0 0.0
        %763 = vmatprep.subr.mxu0 0.0
        %764 = vmatpush1.msra.mxu0 0.0
        %765 = vmatprep.subr.mxu0 0.0
        %766 = vmatpush1.msra.mxu0 0.0
        %767 = vmatprep.subr.mxu0 0.0
        %768 = vmatpush1.msra.mxu0 0.0
        %769 = vmatprep.subr.mxu0 0.0
        %770 = vmatpush1.msra.mxu0 0.0
        %771 = vmatprep.subr.mxu0 0.0
        %772 = vmatpush1.msra.mxu0 0.0
        %773 = vmatprep.subr.mxu0 0.0
        %774 = vmatpush1.msra.mxu0 0.0
        %775 = vmatprep.subr.mxu0 0.0
        %776 = vmatpush1.msra.mxu0 0.0
        %777 = vmatprep.subr.mxu0 0.0
        %778 = vmatpush1.msra.mxu0 0.0
        %779 = vmatprep.subr.mxu0 0.0
        %780 = vmatpush1.msra.mxu0 0.0
        %781 = vmatprep.subr.mxu0 0.0
        %782 = vmatpush1.msra.mxu0 0.0
        %783 = vmatprep.subr.mxu0 0.0
        %784 = vmatpush1.msra.mxu0 0.0
        %785 = vmatprep.subr.mxu0 0.0
        %786 = vmatpush1.msra.mxu0 0.0
        %787 = vmatprep.subr.mxu0 0.0
        %788 = vmatpush1.msra.mxu0 0.0
        %789 = vmatprep.subr.mxu0 0.0
        %790 = vmatpush1.msra.mxu0 0.0
        %791 = vmatprep.subr.mxu0 0.0
        %792 = vmatpush1.msra.mxu0 0.0
        %793 = vmatprep.subr.mxu0 0.0
        %794 = vmatpush1.msra.mxu0 0.0
        %795 = vmatprep.subr.mxu0 0.0
        %796 = vmatpush1.msra.mxu0 0.0
        %797 = vmatprep.subr.mxu0 0.0
        %798 = vmatpush1.msra.mxu0 0.0
        %799 = vmatprep.subr.mxu0 0.0
        %800 = vmatpush1.msra.mxu0 0.0
        %801 = vmatprep.subr.mxu0 0.0
        %802 = vmatpush1.msra.mxu0 0.0
        %803 = vmatprep.subr.mxu0 0.0
        %804 = vmatpush1.msra.mxu0 0.0
        %805 = vmatprep.subr.mxu0 0.0
        %806 = vmatpush1.msra.mxu0 0.0
        %807 = vmatprep.subr.mxu0 0.0
        %808 = vmatpush1.msra.mxu0 0.0
        %809 = vmatprep.mubr.f32.mxu0 0.0
        %810 = vmatmul.mubr.f32.gmra.mrb[0].mxu0 %v743
        %v811 = vpop.f32.mrb[0].mxu0
        %v812 = vadd.f32 %v740, %v811
        %v813 = vpop.f32.mrb[0].mxu0
        %814 = vdwg.mxu0
        %v815 = vmul.f32 %v644, 0.35355338
        %vm816 = vcmask 64512
        %v818 = vsel %vm816, %v815, 0
        %v821 = vsel %vm816, %v728, 0
        %823 = vmatprep.subr.mxu0 0.0
        %824 = vmatpush1.xpose.msra.mxu0 %v821
        %825 = vmatprep.subr.mxu0 0.0
        %826 = vmatpush1.xpose.msra.mxu0 0.0
        %827 = vmatprep.subr.mxu0 0.0
        %828 = vmatpush1.xpose.msra.mxu0 0.0
        %829 = vmatprep.subr.mxu0 0.0
        %830 = vmatpush1.xpose.msra.mxu0 0.0
        %831 = vmatprep.subr.mxu0 0.0
        %832 = vmatpush1.xpose.msra.mxu0 0.0
        %833 = vmatprep.subr.mxu0 0.0
        %834 = vmatpush1.xpose.msra.mxu0 0.0
        %835 = vmatprep.subr.mxu0 0.0
        %836 = vmatpush1.xpose.msra.mxu0 0.0
        %837 = vmatprep.subr.mxu0 0.0
        %838 = vmatpush1.xpose.msra.mxu0 0.0
        %839 = vmatprep.subr.mxu0 0.0
        %840 = vmatpush1.xpose.msra.mxu0 0.0
        %841 = vmatprep.subr.mxu0 0.0
        %842 = vmatpush1.xpose.msra.mxu0 0.0
        %843 = vmatprep.subr.mxu0 0.0
        %844 = vmatpush1.xpose.msra.mxu0 0.0
        %845 = vmatprep.subr.mxu0 0.0
        %846 = vmatpush1.xpose.msra.mxu0 0.0
        %847 = vmatprep.subr.mxu0 0.0
        %848 = vmatpush1.xpose.msra.mxu0 0.0
        %849 = vmatprep.subr.mxu0 0.0
        %850 = vmatpush1.xpose.msra.mxu0 0.0
        %851 = vmatprep.subr.mxu0 0.0
        %852 = vmatpush1.xpose.msra.mxu0 0.0
        %853 = vmatprep.subr.mxu0 0.0
        %854 = vmatpush1.xpose.msra.mxu0 0.0
        %855 = vmatprep.subr.mxu0 0.0
        %856 = vmatpush1.xpose.msra.mxu0 0.0
        %857 = vmatprep.subr.mxu0 0.0
        %858 = vmatpush1.xpose.msra.mxu0 0.0
        %859 = vmatprep.subr.mxu0 0.0
        %860 = vmatpush1.xpose.msra.mxu0 0.0
        %861 = vmatprep.subr.mxu0 0.0
        %862 = vmatpush1.xpose.msra.mxu0 0.0
        %863 = vmatprep.subr.mxu0 0.0
        %864 = vmatpush1.xpose.msra.mxu0 0.0
        %865 = vmatprep.subr.mxu0 0.0
        %866 = vmatpush1.xpose.msra.mxu0 0.0
        %867 = vmatprep.subr.mxu0 0.0
        %868 = vmatpush1.xpose.msra.mxu0 0.0
        %869 = vmatprep.subr.mxu0 0.0
        %870 = vmatpush1.xpose.msra.mxu0 0.0
        %871 = vmatprep.subr.mxu0 0.0
        %872 = vmatpush1.xpose.msra.mxu0 0.0
        %873 = vmatprep.subr.mxu0 0.0
        %874 = vmatpush1.xpose.msra.mxu0 0.0
        %875 = vmatprep.subr.mxu0 0.0
        %876 = vmatpush1.xpose.msra.mxu0 0.0
        %877 = vmatprep.subr.mxu0 0.0
        %878 = vmatpush1.xpose.msra.mxu0 0.0
        %879 = vmatprep.subr.mxu0 0.0
        %880 = vmatpush1.xpose.msra.mxu0 0.0
        %881 = vmatprep.subr.mxu0 0.0
        %882 = vmatpush1.xpose.msra.mxu0 0.0
        %883 = vmatprep.subr.mxu0 0.0
        %884 = vmatpush1.xpose.msra.mxu0 0.0
        %885 = vmatprep.subr.mxu0 0.0
        %886 = vmatpush1.xpose.msra.mxu0 0.0
        %887 = vmatprep.mubr.f32.mxu0 0.0
        %888 = vmatmul.mubr.f32.gmra.mrb[0].mxu0 %v818
        %v889 = vpop.f32.mrb[0].mxu0
        %v890 = vadd.f32 0.0, %v889
        %v891 = vpop.f32.mrb[0].mxu0
        %892 = vdwg.mxu0
        %vm893 = vcmp.eq.s32.totalorder %v561, 0
        %v894 = vsel %vm893, 1, 0
        %v895 = vlaneseq
        %v896 = vshrl.u32 %v895, 7
        %v897 = vsub.s32 0, %v896
        %v898 = vrot.slane %v894, %v897
        %vm899 = vcmp.eq.s32.totalorder %v898, 1
        %v900 = vsel %vm899, -1e+09, %v890
        %v901 = vsel %vm816, %v900, -inf
        %902 = vmax.xlane.f32.xlu0 %v901
        %v903 = vpop.xlane.xlu0 %902
        %v904 = vsub.f32 %v900, %v903
        %v905 = vmul.f32 %v904, 1.442695
        %v906 = vpow.pop %v905
        %v907 = vsel %vm816, %v906, 0.0
        %908 = vadd.xlane.f32.xlu0 %v907
        %v909 = vpop.xlane.xlu0 %908
        %v911 = vsel %vm816, %v906, 0
        %913 = vmatprep.subr.mxu0 0.0
        %914 = vmatpush1.msra.mxu0 %v812
        %915 = vmatprep.subr.mxu0 0.0
        %916 = vmatpush1.msra.mxu0 0.0
        %917 = vmatprep.subr.mxu0 0.0
        %918 = vmatpush1.msra.mxu0 0.0
        %919 = vmatprep.subr.mxu0 0.0
        %920 = vmatpush1.msra.mxu0 0.0
        %921 = vmatprep.subr.mxu0 0.0
        %922 = vmatpush1.msra.mxu0 0.0
        %923 = vmatprep.subr.mxu0 0.0
        %924 = vmatpush1.msra.mxu0 0.0
        %925 = vmatprep.subr.mxu0 0.0
        %926 = vmatpush1.msra.mxu0 0.0
        %927 = vmatprep.subr.mxu0 0.0
        %928 = vmatpush1.msra.mxu0 0.0
        %929 = vmatprep.subr.mxu0 0.0
        %930 = vmatpush1.msra.mxu0 0.0
        %931 = vmatprep.subr.mxu0 0.0
        %932 = vmatpush1.msra.mxu0 0.0
        %933 = vmatprep.subr.mxu0 0.0
        %934 = vmatpush1.msra.mxu0 0.0
        %935 = vmatprep.subr.mxu0 0.0
        %936 = vmatpush1.msra.mxu0 0.0
        %937 = vmatprep.subr.mxu0 0.0
        %938 = vmatpush1.msra.mxu0 0.0
        %939 = vmatprep.subr.mxu0 0.0
        %940 = vmatpush1.msra.mxu0 0.0
        %941 = vmatprep.subr.mxu0 0.0
        %942 = vmatpush1.msra.mxu0 0.0
        %943 = vmatprep.subr.mxu0 0.0
        %944 = vmatpush1.msra.mxu0 0.0
        %945 = vmatprep.subr.mxu0 0.0
        %946 = vmatpush1.msra.mxu0 0.0
        %947 = vmatprep.subr.mxu0 0.0
        %948 = vmatpush1.msra.mxu0 0.0
        %949 = vmatprep.subr.mxu0 0.0
        %950 = vmatpush1.msra.mxu0 0.0
        %951 = vmatprep.subr.mxu0 0.0
        %952 = vmatpush1.msra.mxu0 0.0
        %953 = vmatprep.subr.mxu0 0.0
        %954 = vmatpush1.msra.mxu0 0.0
        %955 = vmatprep.subr.mxu0 0.0
        %956 = vmatpush1.msra.mxu0 0.0
        %957 = vmatprep.subr.mxu0 0.0
        %958 = vmatpush1.msra.mxu0 0.0
        %959 = vmatprep.subr.mxu0 0.0
        %960 = vmatpush1.msra.mxu0 0.0
        %961 = vmatprep.subr.mxu0 0.0
        %962 = vmatpush1.msra.mxu0 0.0
        %963 = vmatprep.subr.mxu0 0.0
        %964 = vmatpush1.msra.mxu0 0.0
        %965 = vmatprep.subr.mxu0 0.0
        %966 = vmatpush1.msra.mxu0 0.0
        %967 = vmatprep.subr.mxu0 0.0
        %968 = vmatpush1.msra.mxu0 0.0
        %969 = vmatprep.subr.mxu0 0.0
        %970 = vmatpush1.msra.mxu0 0.0
        %971 = vmatprep.subr.mxu0 0.0
        %972 = vmatpush1.msra.mxu0 0.0
        %973 = vmatprep.subr.mxu0 0.0
        %974 = vmatpush1.msra.mxu0 0.0
        %975 = vmatprep.subr.mxu0 0.0
        %976 = vmatpush1.msra.mxu0 0.0
        %977 = vmatprep.mubr.f32.mxu0 0.0
        %978 = vmatmul.mubr.f32.gmra.mrb[0].mxu0 %v911
        %v979 = vpop.f32.mrb[0].mxu0
        %v980 = vadd.f32 0.0, %v979
        %v981 = vpop.f32.mrb[0].mxu0
        %982 = vdwg.mxu0
        %v983 = vrcp.pop %v909
        %v984 = vmul.f32 %v980, %v983
        %985 = vrot.lane.b32.xlu0 %v815, 120
        %v986 = vpop.permute.xlu0 %985
        %987 = vrot.lane.b32.xlu0 %v728, 120
        %v988 = vpop.permute.xlu0 %987
        %v989 = vsel %vm816, %v986, 0
        %v991 = vsel %vm816, %v988, 0
        %993 = vmatprep.subr.mxu0 0.0
        %994 = vmatpush1.xpose.msra.mxu0 %v991
        %995 = vmatprep.subr.mxu0 0.0
        %996 = vmatpush1.xpose.msra.mxu0 0.0
        %997 = vmatprep.subr.mxu0 0.0
        %998 = vmatpush1.xpose.msra.mxu0 0.0
        %999 = vmatprep.subr.mxu0 0.0
        %1000 = vmatpush1.xpose.msra.mxu0 0.0
        %1001 = vmatprep.subr.mxu0 0.0
        %1002 = vmatpush1.xpose.msra.mxu0 0.0
        %1003 = vmatprep.subr.mxu0 0.0
        %1004 = vmatpush1.xpose.msra.mxu0 0.0
        %1005 = vmatprep.subr.mxu0 0.0
        %1006 = vmatpush1.xpose.msra.mxu0 0.0
        %1007 = vmatprep.subr.mxu0 0.0
        %1008 = vmatpush1.xpose.msra.mxu0 0.0
        %1009 = vmatprep.subr.mxu0 0.0
        %1010 = vmatpush1.xpose.msra.mxu0 0.0
        %1011 = vmatprep.subr.mxu0 0.0
        %1012 = vmatpush1.xpose.msra.mxu0 0.0
        %1013 = vmatprep.subr.mxu0 0.0
        %1014 = vmatpush1.xpose.msra.mxu0 0.0
        %1015 = vmatprep.subr.mxu0 0.0
        %1016 = vmatpush1.xpose.msra.mxu0 0.0
        %1017 = vmatprep.subr.mxu0 0.0
        %1018 = vmatpush1.xpose.msra.mxu0 0.0
        %1019 = vmatprep.subr.mxu0 0.0
        %1020 = vmatpush1.xpose.msra.mxu0 0.0
        %1021 = vmatprep.subr.mxu0 0.0
        %1022 = vmatpush1.xpose.msra.mxu0 0.0
        %1023 = vmatprep.subr.mxu0 0.0
        %1024 = vmatpush1.xpose.msra.mxu0 0.0
        %1025 = vmatprep.subr.mxu0 0.0
        %1026 = vmatpush1.xpose.msra.mxu0 0.0
        %1027 = vmatprep.subr.mxu0 0.0
        %1028 = vmatpush1.xpose.msra.mxu0 0.0
        %1029 = vmatprep.subr.mxu0 0.0
        %1030 = vmatpush1.xpose.msra.mxu0 0.0
        %1031 = vmatprep.subr.mxu0 0.0
        %1032 = vmatpush1.xpose.msra.mxu0 0.0
        %1033 = vmatprep.subr.mxu0 0.0
        %1034 = vmatpush1.xpose.msra.mxu0 0.0
        %1035 = vmatprep.subr.mxu0 0.0
        %1036 = vmatpush1.xpose.msra.mxu0 0.0
        %1037 = vmatprep.subr.mxu0 0.0
        %1038 = vmatpush1.xpose.msra.mxu0 0.0
        %1039 = vmatprep.subr.mxu0 0.0
        %1040 = vmatpush1.xpose.msra.mxu0 0.0
        %1041 = vmatprep.subr.mxu0 0.0
        %1042 = vmatpush1.xpose.msra.mxu0 0.0
        %1043 = vmatprep.subr.mxu0 0.0
        %1044 = vmatpush1.xpose.msra.mxu0 0.0
        %1045 = vmatprep.subr.mxu0 0.0
        %1046 = vmatpush1.xpose.msra.mxu0 0.0
        %1047 = vmatprep.subr.mxu0 0.0
        %1048 = vmatpush1.xpose.msra.mxu0 0.0
        %1049 = vmatprep.subr.mxu0 0.0
        %1050 = vmatpush1.xpose.msra.mxu0 0.0
        %1051 = vmatprep.subr.mxu0 0.0
        %1052 = vmatpush1.xpose.msra.mxu0 0.0
        %1053 = vmatprep.subr.mxu0 0.0
        %1054 = vmatpush1.xpose.msra.mxu0 0.0
        %1055 = vmatprep.subr.mxu0 0.0
        %1056 = vmatpush1.xpose.msra.mxu0 0.0
        %1057 = vmatprep.mubr.f32.mxu0 0.0
        %1058 = vmatmul.mubr.f32.gmra.mrb[0].mxu0 %v989
        %v1059 = vpop.f32.mrb[0].mxu0
        %v1060 = vadd.f32 0.0, %v1059
        %v1061 = vpop.f32.mrb[0].mxu0
        %1062 = vdwg.mxu0
        %v1063 = vsel %vm899, -1e+09, %v1060
        %v1064 = vsel %vm816, %v1063, -inf
        %1065 = vmax.xlane.f32.xlu0 %v1064
        %v1066 = vpop.xlane.xlu0 %1065
        %v1067 = vsub.f32 %v1063, %v1066
        %v1068 = vmul.f32 %v1067, 1.442695
        %v1069 = vpow.pop %v1068
        %v1070 = vsel %vm816, %v1069, 0.0
        %1071 = vadd.xlane.f32.xlu0 %v1070
        %v1072 = vpop.xlane.xlu0 %1071
        %1074 = vrot.lane.b32.xlu0 %v812, 120
        %v1075 = vpop.permute.xlu0 %1074
        %v1078 = vsel %vm816, %v1069, 0
        %1080 = vmatprep.subr.mxu0 0.0
        %1081 = vmatpush1.msra.mxu0 %v1075
        %1082 = vmatprep.subr.mxu0 0.0
        %1083 = vmatpush1.msra.mxu0 0.0
        %1084 = vmatprep.subr.mxu0 0.0
        %1085 = vmatpush1.msra.mxu0 0.0
        %1086 = vmatprep.subr.mxu0 0.0
        %1087 = vmatpush1.msra.mxu0 0.0
        %1088 = vmatprep.subr.mxu0 0.0
        %1089 = vmatpush1.msra.mxu0 0.0
        %1090 = vmatprep.subr.mxu0 0.0
        %1091 = vmatpush1.msra.mxu0 0.0
        %1092 = vmatprep.subr.mxu0 0.0
        %1093 = vmatpush1.msra.mxu0 0.0
        %1094 = vmatprep.subr.mxu0 0.0
        %1095 = vmatpush1.msra.mxu0 0.0
        %1096 = vmatprep.subr.mxu0 0.0
        %1097 = vmatpush1.msra.mxu0 0.0
        %1098 = vmatprep.subr.mxu0 0.0
        %1099 = vmatpush1.msra.mxu0 0.0
        %1100 = vmatprep.subr.mxu0 0.0
        %1101 = vmatpush1.msra.mxu0 0.0
        %1102 = vmatprep.subr.mxu0 0.0
        %1103 = vmatpush1.msra.mxu0 0.0
        %1104 = vmatprep.subr.mxu0 0.0
        %1105 = vmatpush1.msra.mxu0 0.0
        %1106 = vmatprep.subr.mxu0 0.0
        %1107 = vmatpush1.msra.mxu0 0.0
        %1108 = vmatprep.subr.mxu0 0.0
        %1109 = vmatpush1.msra.mxu0 0.0
        %1110 = vmatprep.subr.mxu0 0.0
        %1111 = vmatpush1.msra.mxu0 0.0
        %1112 = vmatprep.subr.mxu0 0.0
        %1113 = vmatpush1.msra.mxu0 0.0
        %1114 = vmatprep.subr.mxu0 0.0
        %1115 = vmatpush1.msra.mxu0 0.0
        %1116 = vmatprep.subr.mxu0 0.0
        %1117 = vmatpush1.msra.mxu0 0.0
        %1118 = vmatprep.subr.mxu0 0.0
        %1119 = vmatpush1.msra.mxu0 0.0
        %1120 = vmatprep.subr.mxu0 0.0
        %1121 = vmatpush1.msra.mxu0 0.0
        %1122 = vmatprep.subr.mxu0 0.0
        %1123 = vmatpush1.msra.mxu0 0.0
        %1124 = vmatprep.subr.mxu0 0.0
        %1125 = vmatpush1.msra.mxu0 0.0
        %1126 = vmatprep.subr.mxu0 0.0
        %1127 = vmatpush1.msra.mxu0 0.0
        %1128 = vmatprep.subr.mxu0 0.0
        %1129 = vmatpush1.msra.mxu0 0.0
        %1130 = vmatprep.subr.mxu0 0.0
        %1131 = vmatpush1.msra.mxu0 0.0
        %1132 = vmatprep.subr.mxu0 0.0
        %1133 = vmatpush1.msra.mxu0 0.0
        %1134 = vmatprep.subr.mxu0 0.0
        %1135 = vmatpush1.msra.mxu0 0.0
        %1136 = vmatprep.subr.mxu0 0.0
        %1137 = vmatpush1.msra.mxu0 0.0
        %1138 = vmatprep.subr.mxu0 0.0
        %1139 = vmatpush1.msra.mxu0 0.0
        %1140 = vmatprep.subr.mxu0 0.0
        %1141 = vmatpush1.msra.mxu0 0.0
        %1142 = vmatprep.subr.mxu0 0.0
        %1143 = vmatpush1.msra.mxu0 0.0
        %1144 = vmatprep.mubr.f32.mxu0 0.0
        %1145 = vmatmul.mubr.f32.gmra.mrb[0].mxu0 %v1078
        %v1146 = vpop.f32.mrb[0].mxu0
        %v1147 = vadd.f32 0.0, %v1146
        %v1148 = vpop.f32.mrb[0].mxu0
        %1149 = vdwg.mxu0
        %v1150 = vrcp.pop %v1072
        %v1151 = vmul.f32 %v1147, %v1150
        %1152 = vrot.lane.b32.xlu0 %v815, 112
        %v1153 = vpop.permute.xlu0 %1152
        %1154 = vrot.lane.b32.xlu0 %v728, 112
        %v1155 = vpop.permute.xlu0 %1154
        %v1156 = vsel %vm816, %v1153, 0
        %v1158 = vsel %vm816, %v1155, 0
        %1160 = vmatprep.subr.mxu0 0.0
        %1161 = vmatpush1.xpose.msra.mxu0 %v1158
        %1162 = vmatprep.subr.mxu0 0.0
        %1163 = vmatpush1.xpose.msra.mxu0 0.0
        %1164 = vmatprep.subr.mxu0 0.0
        %1165 = vmatpush1.xpose.msra.mxu0 0.0
        %1166 = vmatprep.subr.mxu0 0.0
        %1167 = vmatpush1.xpose.msra.mxu0 0.0
        %1168 = vmatprep.subr.mxu0 0.0
        %1169 = vmatpush1.xpose.msra.mxu0 0.0
        %1170 = vmatprep.subr.mxu0 0.0
        %1171 = vmatpush1.xpose.msra.mxu0 0.0
        %1172 = vmatprep.subr.mxu0 0.0
        %1173 = vmatpush1.xpose.msra.mxu0 0.0
        %1174 = vmatprep.subr.mxu0 0.0
        %1175 = vmatpush1.xpose.msra.mxu0 0.0
        %1176 = vmatprep.subr.mxu0 0.0
        %1177 = vmatpush1.xpose.msra.mxu0 0.0
        %1178 = vmatprep.subr.mxu0 0.0
        %1179 = vmatpush1.xpose.msra.mxu0 0.0
        %1180 = vmatprep.subr.mxu0 0.0
        %1181 = vmatpush1.xpose.msra.mxu0 0.0
        %1182 = vmatprep.subr.mxu0 0.0
        %1183 = vmatpush1.xpose.msra.mxu0 0.0
        %1184 = vmatprep.subr.mxu0 0.0
        %1185 = vmatpush1.xpose.msra.mxu0 0.0
        %1186 = vmatprep.subr.mxu0 0.0
        %1187 = vmatpush1.xpose.msra.mxu0 0.0
        %1188 = vmatprep.subr.mxu0 0.0
        %1189 = vmatpush1.xpose.msra.mxu0 0.0
        %1190 = vmatprep.subr.mxu0 0.0
        %1191 = vmatpush1.xpose.msra.mxu0 0.0
        %1192 = vmatprep.subr.mxu0 0.0
        %1193 = vmatpush1.xpose.msra.mxu0 0.0
        %1194 = vmatprep.subr.mxu0 0.0
        %1195 = vmatpush1.xpose.msra.mxu0 0.0
        %1196 = vmatprep.subr.mxu0 0.0
        %1197 = vmatpush1.xpose.msra.mxu0 0.0
        %1198 = vmatprep.subr.mxu0 0.0
        %1199 = vmatpush1.xpose.msra.mxu0 0.0
        %1200 = vmatprep.subr.mxu0 0.0
        %1201 = vmatpush1.xpose.msra.mxu0 0.0
        %1202 = vmatprep.subr.mxu0 0.0
        %1203 = vmatpush1.xpose.msra.mxu0 0.0
        %1204 = vmatprep.subr.mxu0 0.0
        %1205 = vmatpush1.xpose.msra.mxu0 0.0
        %1206 = vmatprep.subr.mxu0 0.0
        %1207 = vmatpush1.xpose.msra.mxu0 0.0
        %1208 = vmatprep.subr.mxu0 0.0
        %1209 = vmatpush1.xpose.msra.mxu0 0.0
        %1210 = vmatprep.subr.mxu0 0.0
        %1211 = vmatpush1.xpose.msra.mxu0 0.0
        %1212 = vmatprep.subr.mxu0 0.0
        %1213 = vmatpush1.xpose.msra.mxu0 0.0
        %1214 = vmatprep.subr.mxu0 0.0
        %1215 = vmatpush1.xpose.msra.mxu0 0.0
        %1216 = vmatprep.subr.mxu0 0.0
        %1217 = vmatpush1.xpose.msra.mxu0 0.0
        %1218 = vmatprep.subr.mxu0 0.0
        %1219 = vmatpush1.xpose.msra.mxu0 0.0
        %1220 = vmatprep.subr.mxu0 0.0
        %1221 = vmatpush1.xpose.msra.mxu0 0.0
        %1222 = vmatprep.subr.mxu0 0.0
        %1223 = vmatpush1.xpose.msra.mxu0 0.0
        %1224 = vmatprep.mubr.f32.mxu0 0.0
        %1225 = vmatmul.mubr.f32.gmra.mrb[0].mxu0 %v1156
        %v1226 = vpop.f32.mrb[0].mxu0
        %v1227 = vadd.f32 0.0, %v1226
        %v1228 = vpop.f32.mrb[0].mxu0
        %1229 = vdwg.mxu0
        %v1230 = vsel %vm899, -1e+09, %v1227
        %v1231 = vsel %vm816, %v1230, -inf
        %1232 = vmax.xlane.f32.xlu0 %v1231
        %v1233 = vpop.xlane.xlu0 %1232
        %v1234 = vsub.f32 %v1230, %v1233
        %v1235 = vmul.f32 %v1234, 1.442695
        %v1236 = vpow.pop %v1235
        %v1237 = vsel %vm816, %v1236, 0.0
        %1238 = vadd.xlane.f32.xlu0 %v1237
        %v1239 = vpop.xlane.xlu0 %1238
        %1240 = vrot.lane.b32.xlu0 %v812, 112
        %v1241 = vpop.permute.xlu0 %1240
        %v1244 = vsel %vm816, %v1236, 0
        %1246 = vmatprep.subr.mxu0 0.0
        %1247 = vmatpush1.msra.mxu0 %v1241
        %1248 = vmatprep.subr.mxu0 0.0
        %1249 = vmatpush1.msra.mxu0 0.0
        %1250 = vmatprep.subr.mxu0 0.0
        %1251 = vmatpush1.msra.mxu0 0.0
        %1252 = vmatprep.subr.mxu0 0.0
        %1253 = vmatpush1.msra.mxu0 0.0
        %1254 = vmatprep.subr.mxu0 0.0
        %1255 = vmatpush1.msra.mxu0 0.0
        %1256 = vmatprep.subr.mxu0 0.0
        %1257 = vmatpush1.msra.mxu0 0.0
        %1258 = vmatprep.subr.mxu0 0.0
        %1259 = vmatpush1.msra.mxu0 0.0
        %1260 = vmatprep.subr.mxu0 0.0
        %1261 = vmatpush1.msra.mxu0 0.0
        %1262 = vmatprep.subr.mxu0 0.0
        %1263 = vmatpush1.msra.mxu0 0.0
        %1264 = vmatprep.subr.mxu0 0.0
        %1265 = vmatpush1.msra.mxu0 0.0
        %1266 = vmatprep.subr.mxu0 0.0
        %1267 = vmatpush1.msra.mxu0 0.0
        %1268 = vmatprep.subr.mxu0 0.0
        %1269 = vmatpush1.msra.mxu0 0.0
        %1270 = vmatprep.subr.mxu0 0.0
        %1271 = vmatpush1.msra.mxu0 0.0
        %1272 = vmatprep.subr.mxu0 0.0
        %1273 = vmatpush1.msra.mxu0 0.0
        %1274 = vmatprep.subr.mxu0 0.0
        %1275 = vmatpush1.msra.mxu0 0.0
        %1276 = vmatprep.subr.mxu0 0.0
        %1277 = vmatpush1.msra.mxu0 0.0
        %1278 = vmatprep.subr.mxu0 0.0
        %1279 = vmatpush1.msra.mxu0 0.0
        %1280 = vmatprep.subr.mxu0 0.0
        %1281 = vmatpush1.msra.mxu0 0.0
        %1282 = vmatprep.subr.mxu0 0.0
        %1283 = vmatpush1.msra.mxu0 0.0
        %1284 = vmatprep.subr.mxu0 0.0
        %1285 = vmatpush1.msra.mxu0 0.0
        %1286 = vmatprep.subr.mxu0 0.0
        %1287 = vmatpush1.msra.mxu0 0.0
        %1288 = vmatprep.subr.mxu0 0.0
        %1289 = vmatpush1.msra.mxu0 0.0
        %1290 = vmatprep.subr.mxu0 0.0
        %1291 = vmatpush1.msra.mxu0 0.0
        %1292 = vmatprep.subr.mxu0 0.0
        %1293 = vmatpush1.msra.mxu0 0.0
        %1294 = vmatprep.subr.mxu0 0.0
        %1295 = vmatpush1.msra.mxu0 0.0
        %1296 = vmatprep.subr.mxu0 0.0
        %1297 = vmatpush1.msra.mxu0 0.0
        %1298 = vmatprep.subr.mxu0 0.0
        %1299 = vmatpush1.msra.mxu0 0.0
        %1300 = vmatprep.subr.mxu0 0.0
        %1301 = vmatpush1.msra.mxu0 0.0
        %1302 = vmatprep.subr.mxu0 0.0
        %1303 = vmatpush1.msra.mxu0 0.0
        %1304 = vmatprep.subr.mxu0 0.0
        %1305 = vmatpush1.msra.mxu0 0.0
        %1306 = vmatprep.subr.mxu0 0.0
        %1307 = vmatpush1.msra.mxu0 0.0
        %1308 = vmatprep.subr.mxu0 0.0
        %1309 = vmatpush1.msra.mxu0 0.0
        %1310 = vmatprep.mubr.f32.mxu0 0.0
        %1311 = vmatmul.mubr.f32.gmra.mrb[0].mxu0 %v1244
        %v1312 = vpop.f32.mrb[0].mxu0
        %v1313 = vadd.f32 0.0, %v1312
        %v1314 = vpop.f32.mrb[0].mxu0
        %1315 = vdwg.mxu0
        %v1316 = vrcp.pop %v1239
        %v1317 = vmul.f32 %v1313, %v1316
        %1318 = vrot.lane.b32.xlu0 %v815, 104
        %v1319 = vpop.permute.xlu0 %1318
        %1320 = vrot.lane.b32.xlu0 %v728, 104
        %v1321 = vpop.permute.xlu0 %1320
        %v1322 = vsel %vm816, %v1319, 0
        %v1324 = vsel %vm816, %v1321, 0
        %1326 = vmatprep.subr.mxu0 0.0
        %1327 = vmatpush1.xpose.msra.mxu0 %v1324
        %1328 = vmatprep.subr.mxu0 0.0
        %1329 = vmatpush1.xpose.msra.mxu0 0.0
        %1330 = vmatprep.subr.mxu0 0.0
        %1331 = vmatpush1.xpose.msra.mxu0 0.0
        %1332 = vmatprep.subr.mxu0 0.0
        %1333 = vmatpush1.xpose.msra.mxu0 0.0
        %1334 = vmatprep.subr.mxu0 0.0
        %1335 = vmatpush1.xpose.msra.mxu0 0.0
        %1336 = vmatprep.subr.mxu0 0.0
        %1337 = vmatpush1.xpose.msra.mxu0 0.0
        %1338 = vmatprep.subr.mxu0 0.0
        %1339 = vmatpush1.xpose.msra.mxu0 0.0
        %1340 = vmatprep.subr.mxu0 0.0
        %1341 = vmatpush1.xpose.msra.mxu0 0.0
        %1342 = vmatprep.subr.mxu0 0.0
        %1343 = vmatpush1.xpose.msra.mxu0 0.0
        %1344 = vmatprep.subr.mxu0 0.0
        %1345 = vmatpush1.xpose.msra.mxu0 0.0
        %1346 = vmatprep.subr.mxu0 0.0
        %1347 = vmatpush1.xpose.msra.mxu0 0.0
        %1348 = vmatprep.subr.mxu0 0.0
        %1349 = vmatpush1.xpose.msra.mxu0 0.0
        %1350 = vmatprep.subr.mxu0 0.0
        %1351 = vmatpush1.xpose.msra.mxu0 0.0
        %1352 = vmatprep.subr.mxu0 0.0
        %1353 = vmatpush1.xpose.msra.mxu0 0.0
        %1354 = vmatprep.subr.mxu0 0.0
        %1355 = vmatpush1.xpose.msra.mxu0 0.0
        %1356 = vmatprep.subr.mxu0 0.0
        %1357 = vmatpush1.xpose.msra.mxu0 0.0
        %1358 = vmatprep.subr.mxu0 0.0
        %1359 = vmatpush1.xpose.msra.mxu0 0.0
        %1360 = vmatprep.subr.mxu0 0.0
        %1361 = vmatpush1.xpose.msra.mxu0 0.0
        %1362 = vmatprep.subr.mxu0 0.0
        %1363 = vmatpush1.xpose.msra.mxu0 0.0
        %1364 = vmatprep.subr.mxu0 0.0
        %1365 = vmatpush1.xpose.msra.mxu0 0.0
        %1366 = vmatprep.subr.mxu0 0.0
        %1367 = vmatpush1.xpose.msra.mxu0 0.0
        %1368 = vmatprep.subr.mxu0 0.0
        %1369 = vmatpush1.xpose.msra.mxu0 0.0
        %1370 = vmatprep.subr.mxu0 0.0
        %1371 = vmatpush1.xpose.msra.mxu0 0.0
        %1372 = vmatprep.subr.mxu0 0.0
        %1373 = vmatpush1.xpose.msra.mxu0 0.0
        %1374 = vmatprep.subr.mxu0 0.0
        %1375 = vmatpush1.xpose.msra.mxu0 0.0
        %1376 = vmatprep.subr.mxu0 0.0
        %1377 = vmatpush1.xpose.msra.mxu0 0.0
        %1378 = vmatprep.subr.mxu0 0.0
        %1379 = vmatpush1.xpose.msra.mxu0 0.0
        %1380 = vmatprep.subr.mxu0 0.0
        %1381 = vmatpush1.xpose.msra.mxu0 0.0
        %1382 = vmatprep.subr.mxu0 0.0
        %1383 = vmatpush1.xpose.msra.mxu0 0.0
        %1384 = vmatprep.subr.mxu0 0.0
        %1385 = vmatpush1.xpose.msra.mxu0 0.0
        %1386 = vmatprep.subr.mxu0 0.0
        %1387 = vmatpush1.xpose.msra.mxu0 0.0
        %1388 = vmatprep.subr.mxu0 0.0
        %1389 = vmatpush1.xpose.msra.mxu0 0.0
        %1390 = vmatprep.mubr.f32.mxu0 0.0
        %1391 = vmatmul.mubr.f32.gmra.mrb[0].mxu0 %v1322
        %v1392 = vpop.f32.mrb[0].mxu0
        %v1393 = vadd.f32 0.0, %v1392
        %v1394 = vpop.f32.mrb[0].mxu0
        %1395 = vdwg.mxu0
        %v1396 = vsel %vm899, -1e+09, %v1393
        %v1397 = vsel %vm816, %v1396, -inf
        %1398 = vmax.xlane.f32.xlu0 %v1397
        %v1399 = vpop.xlane.xlu0 %1398
        %v1400 = vsub.f32 %v1396, %v1399
        %v1401 = vmul.f32 %v1400, 1.442695
        %v1402 = vpow.pop %v1401
        %v1403 = vsel %vm816, %v1402, 0.0
        %1404 = vadd.xlane.f32.xlu0 %v1403
        %v1405 = vpop.xlane.xlu0 %1404
        %1406 = vrot.lane.b32.xlu0 %v812, 104
        %v1407 = vpop.permute.xlu0 %1406
        %v1410 = vsel %vm816, %v1402, 0
        %1412 = vmatprep.subr.mxu0 0.0
        %1413 = vmatpush1.msra.mxu0 %v1407
        %1414 = vmatprep.subr.mxu0 0.0
        %1415 = vmatpush1.msra.mxu0 0.0
        %1416 = vmatprep.subr.mxu0 0.0
        %1417 = vmatpush1.msra.mxu0 0.0
        %1418 = vmatprep.subr.mxu0 0.0
        %1419 = vmatpush1.msra.mxu0 0.0
        %1420 = vmatprep.subr.mxu0 0.0
        %1421 = vmatpush1.msra.mxu0 0.0
        %1422 = vmatprep.subr.mxu0 0.0
        %1423 = vmatpush1.msra.mxu0 0.0
        %1424 = vmatprep.subr.mxu0 0.0
        %1425 = vmatpush1.msra.mxu0 0.0
        %1426 = vmatprep.subr.mxu0 0.0
        %1427 = vmatpush1.msra.mxu0 0.0
        %1428 = vmatprep.subr.mxu0 0.0
        %1429 = vmatpush1.msra.mxu0 0.0
        %1430 = vmatprep.subr.mxu0 0.0
        %1431 = vmatpush1.msra.mxu0 0.0
        %1432 = vmatprep.subr.mxu0 0.0
        %1433 = vmatpush1.msra.mxu0 0.0
        %1434 = vmatprep.subr.mxu0 0.0
        %1435 = vmatpush1.msra.mxu0 0.0
        %1436 = vmatprep.subr.mxu0 0.0
        %1437 = vmatpush1.msra.mxu0 0.0
        %1438 = vmatprep.subr.mxu0 0.0
        %1439 = vmatpush1.msra.mxu0 0.0
        %1440 = vmatprep.subr.mxu0 0.0
        %1441 = vmatpush1.msra.mxu0 0.0
        %1442 = vmatprep.subr.mxu0 0.0
        %1443 = vmatpush1.msra.mxu0 0.0
        %1444 = vmatprep.subr.mxu0 0.0
        %1445 = vmatpush1.msra.mxu0 0.0
        %1446 = vmatprep.subr.mxu0 0.0
        %1447 = vmatpush1.msra.mxu0 0.0
        %1448 = vmatprep.subr.mxu0 0.0
        %1449 = vmatpush1.msra.mxu0 0.0
        %1450 = vmatprep.subr.mxu0 0.0
        %1451 = vmatpush1.msra.mxu0 0.0
        %1452 = vmatprep.subr.mxu0 0.0
        %1453 = vmatpush1.msra.mxu0 0.0
        %1454 = vmatprep.subr.mxu0 0.0
        %1455 = vmatpush1.msra.mxu0 0.0
        %1456 = vmatprep.subr.mxu0 0.0
        %1457 = vmatpush1.msra.mxu0 0.0
        %1458 = vmatprep.subr.mxu0 0.0
        %1459 = vmatpush1.msra.mxu0 0.0
        %1460 = vmatprep.subr.mxu0 0.0
        %1461 = vmatpush1.msra.mxu0 0.0
        %1462 = vmatprep.subr.mxu0 0.0
        %1463 = vmatpush1.msra.mxu0 0.0
        %1464 = vmatprep.subr.mxu0 0.0
        %1465 = vmatpush1.msra.mxu0 0.0
        %1466 = vmatprep.subr.mxu0 0.0
        %1467 = vmatpush1.msra.mxu0 0.0
        %1468 = vmatprep.subr.mxu0 0.0
        %1469 = vmatpush1.msra.mxu0 0.0
        %1470 = vmatprep.subr.mxu0 0.0
        %1471 = vmatpush1.msra.mxu0 0.0
        %1472 = vmatprep.subr.mxu0 0.0
        %1473 = vmatpush1.msra.mxu0 0.0
        %1474 = vmatprep.subr.mxu0 0.0
        %1475 = vmatpush1.msra.mxu0 0.0
        %1476 = vmatprep.mubr.f32.mxu0 0.0
        %1477 = vmatmul.mubr.f32.gmra.mrb[0].mxu0 %v1410
        %v1478 = vpop.f32.mrb[0].mxu0
        %v1479 = vadd.f32 0.0, %v1478
        %v1480 = vpop.f32.mrb[0].mxu0
        %1481 = vdwg.mxu0
        %v1482 = vrcp.pop %v1405
        %v1483 = vmul.f32 %v1479, %v1482
        %1485 = vrot.lane.b32.xlu0 %v1151, 8
        %v1486 = vpop.permute.xlu0 %1485
        %1489 = vrot.lane.b32.xlu0 %v1317, 16
        %v1490 = vpop.permute.xlu0 %1489
        %1493 = vrot.lane.b32.xlu0 %v1483, 24
        %v1494 = vpop.permute.xlu0 %1493
        %v1496 = vsel %vm816, %v984, %v1486
        %vm1497 = vcmask 130048
        %v1498 = vsel %vm1497, %v1496, %v1490
        %vm1499 = vcmask 195584
        %v1500 = vsel %vm1499, %v1498, %v1494
        %v1501 = vld [vmem:[%s10] sm:$0xff]
        %v1502 = vld [vmem:[%s10 + $0x8] sm:$0xff]
        %v1503 = vld [vmem:[%s10 + $0x10] sm:$0xff]
        %v1504 = vld [vmem:[%s10 + $0x18] sm:$0xff]
        %v1505 = vld [vmem:[%s11] sm:$0x1]
        %v1507 = vlaneseq
        %v1508 = vshrl.u32 %v1507, 7
        %v1509 = vsub.s32 0, %v1508
        %v1510 = vrot.slane %v1505, %v1509
        %v1513 = vsel %vm573, %v1500, 0
        %1515 = vmatprep.subr.mxu0 0.0
        %1516 = vmatpush1.msra.mxu0 %v1501
        %1517 = vmatprep.subr.mxu0 0.0
        %1518 = vmatpush1.msra.mxu0 %v1502
        %1519 = vmatprep.subr.mxu0 0.0
        %1520 = vmatpush1.msra.mxu0 %v1503
        %1521 = vmatprep.subr.mxu0 0.0
        %1522 = vmatpush1.msra.mxu0 %v1504
        %1523 = vmatprep.subr.mxu0 0.0
        %1524 = vmatpush1.msra.mxu0 0.0
        %1525 = vmatprep.subr.mxu0 0.0
        %1526 = vmatpush1.msra.mxu0 0.0
        %1527 = vmatprep.subr.mxu0 0.0
        %1528 = vmatpush1.msra.mxu0 0.0
        %1529 = vmatprep.subr.mxu0 0.0
        %1530 = vmatpush1.msra.mxu0 0.0
        %1531 = vmatprep.subr.mxu0 0.0
        %1532 = vmatpush1.msra.mxu0 0.0
        %1533 = vmatprep.subr.mxu0 0.0
        %1534 = vmatpush1.msra.mxu0 0.0
        %1535 = vmatprep.subr.mxu0 0.0
        %1536 = vmatpush1.msra.mxu0 0.0
        %1537 = vmatprep.subr.mxu0 0.0
        %1538 = vmatpush1.msra.mxu0 0.0
        %1539 = vmatprep.subr.mxu0 0.0
        %1540 = vmatpush1.msra.mxu0 0.0
        %1541 = vmatprep.subr.mxu0 0.0
        %1542 = vmatpush1.msra.mxu0 0.0
        %1543 = vmatprep.subr.mxu0 0.0
        %1544 = vmatpush1.msra.mxu0 0.0
        %1545 = vmatprep.subr.mxu0 0.0
        %1546 = vmatpush1.msra.mxu0 0.0
        %1547 = vmatprep.subr.mxu0 0.0
        %1548 = vmatpush1.msra.mxu0 0.0
        %1549 = vmatprep.subr.mxu0 0.0
        %1550 = vmatpush1.msra.mxu0 0.0
        %1551 = vmatprep.subr.mxu0 0.0
        %1552 = vmatpush1.msra.mxu0 0.0
        %1553 = vmatprep.subr.mxu0 0.0
        %1554 = vmatpush1.msra.mxu0 0.0
        %1555 = vmatprep.subr.mxu0 0.0
        %1556 = vmatpush1.msra.mxu0 0.0
        %1557 = vmatprep.subr.mxu0 0.0
        %1558 = vmatpush1.msra.mxu0 0.0
        %1559 = vmatprep.subr.mxu0 0.0
        %1560 = vmatpush1.msra.mxu0 0.0
        %1561 = vmatprep.subr.mxu0 0.0
        %1562 = vmatpush1.msra.mxu0 0.0
        %1563 = vmatprep.subr.mxu0 0.0
        %1564 = vmatpush1.msra.mxu0 0.0
        %1565 = vmatprep.subr.mxu0 0.0
        %1566 = vmatpush1.msra.mxu0 0.0
        %1567 = vmatprep.subr.mxu0 0.0
        %1568 = vmatpush1.msra.mxu0 0.0
        %1569 = vmatprep.subr.mxu0 0.0
        %1570 = vmatpush1.msra.mxu0 0.0
        %1571 = vmatprep.subr.mxu0 0.0
        %1572 = vmatpush1.msra.mxu0 0.0
        %1573 = vmatprep.subr.mxu0 0.0
        %1574 = vmatpush1.msra.mxu0 0.0
        %1575 = vmatprep.subr.mxu0 0.0
        %1576 = vmatpush1.msra.mxu0 0.0
        %1577 = vmatprep.subr.mxu0 0.0
        %1578 = vmatpush1.msra.mxu0 0.0
        %1579 = vmatprep.mubr.f32.mxu0 0.0
        %1580 = vmatmul.mubr.f32.gmra.mrb[0].mxu0 %v1513
        %v1581 = vpop.f32.mrb[0].mxu0
        %v1582 = vadd.f32 %v1510, %v1581
        %v1583 = vpop.f32.mrb[0].mxu0
        %1584 = vdwg.mxu0
        %1585 = vst.msk [vmem:[%s554] sm:$0xff] %vm573, %v1582
        %s1586 = sand.u32 %s314, 1
        %s1587 = scalar_lea.sflag [#allocation4], %s1586
        %s1588 = sand.u32 %s314, 1
        %s1589 = smul.addr %s1588, 8
        %s1590 = scalar_lea.vmem [#allocation13], %s1589
        // Predicated region
        $region93: #{tpu_custom_call.1} parent=67 // pred_check
          %p1591 = pneg %p324
        $region94: #{tpu_custom_call.1} parent=67 // pred_check_branch
          %1593 = sbr.rel (%p1591) target = $region96
        $region95: #{tpu_custom_call.1} parent=67 // pred_region
          %s1595 = ssub.s32 128, 128
          %1596 = vsyncadd %s1587, %s1595
          %s1597 = smul.addr %s34, 128
          %s1598 = scalar_lea.hbm %s12, %s1597
          %s1600 = sshll.u32 %s1590, 4
          %s1601 = int_to_ptr.vmem [resolvable:$true] %s1600
          %1603 = dma.vmem_to_hbm [thread:$0]  %s1601, 128, %s1598, %s1587
        $region96: #{tpu_custom_call.1} parent=67 // pred_fallthru
          _
      $region68: #{tpu_custom_call.1} parent=5 // pred_fallthru
        _
      %p1604 = scmp.le.s32.totalorder 2, %s29
      // Predicated region
      $region97: #{tpu_custom_call.1} parent=5 // pred_check
        %p1605 = pneg %p1604
      $region98: #{tpu_custom_call.1} parent=5 // pred_check_branch
        %1607 = sbr.rel (%p1605) target = $region100
      $region99: #{tpu_custom_call.1} parent=5 // pred_region
        %s1608 = ssub.s32 %s29, 2
        // Predicated region
        $region101: #{tpu_custom_call.1} parent=99 // pred_check
          %p1609 = pneg %p330
        $region102: #{tpu_custom_call.1} parent=99 // pred_check_branch
          %1611 = sbr.rel (%p1609) target = $region104
        $region103: #{tpu_custom_call.1} parent=99 // pred_region
          %s1612 = sand.u32 %s315, 1
          %s1613 = scalar_lea.sflag [#allocation4], %s1612
          %s1614 = sand.u32 %s315, 1
          %s1615 = smul.addr %s1614, 8
          %s1616 = scalar_lea.vmem [#allocation13], %s1615
          %1617 = dma.done %s1613, 128
        $region104: #{tpu_custom_call.1} parent=99 // pred_fallthru
          _
      $region100: #{tpu_custom_call.1} parent=5 // pred_fallthru
        _
    $region6: #{tpu_custom_call.1} parent=1 // loop_footer
      %s33 = sadd.s32 1, %s29
    $region7: #{tpu_custom_call.1} parent=1 // loop_footer_branch
      %28 = sbr.rel target = $region3
    $region8: #{tpu_custom_call.1} parent=1 // loop_exit
      _
    %1618 = vsyncpa [#allocation3], 1
    %s1619 = scalar_lea.sflag [#allocation3], 1
    %1620 = vsyncpa %s1619, 1
    %1621 = vsyncpa [#allocation6], 1
    %s1622 = scalar_lea.sflag [#allocation6], 1
    %1623 = vsyncpa %s1622, 1
    %1624 = vsyncpa [#allocation9], 1
    %1625 = vsyncpa [#allocation12], 1
    %1626 = vsyncpa [#allocation4], 1
    %s1627 = scalar_lea.sflag [#allocation4], 1
    %1628 = vsyncpa %s1627, 1

</llo_original>
